<compile_context>
chip_gen: v7x
topology: tpu7x:2x2x1
jax: 0.10.0
libtpu: 0.0.40
codegen_flags: <defaults>
</compile_context>

<pallas_src>
import functools

import jax
import jax.numpy as jnp
from jax.experimental import pallas as pl
from jax.experimental.pallas import tpu as pltpu


# ----------------------------------------------------------------------------
# Helpers
# ----------------------------------------------------------------------------
_VMEM_BUDGET = 40 * 1024 * 1024        # conservative: v7x has 64 MiB physical VMEM per TC
_VMEM_LIMIT_FLOOR = 32 * 1024 * 1024   # raise v5e's 16 MiB default scoped limit
_VMEM_LIMIT_CEIL = 56 * 1024 * 1024    # stay under v7x physical VMEM


def _round_up(x, m):
    return ((x + m - 1) // m) * m


def _layer1_vmem_bytes(tm, tk, R, Hp):
    return (2 * R * tm * tk * 2        # adj tile (bf16), double-buffered
            + 2 * R * tk * Hp * 2      # W1 tile (bf16), double-buffered
            + 2 * tm * Hp * 4          # root1(+b1) tile (f32)
            + 2 * tm * Hp * 2          # h output tile (bf16)
            + tm * Hp * 4)             # f32 accumulator scratch


def _layer2_vmem_bytes(tm, tk, R, Hp, Cp):
    return (2 * R * tm * tk * 2        # adj tile (bf16)
            + 2 * tk * Hp * 2          # h source tile (bf16)
            + 2 * tm * Hp * 2          # h dst tile (bf16, root operand)
            + 2 * (R + 1) * Hp * Cp * 2  # stacked W2/root2 (bf16)
            + 2 * Cp * 4               # bias
            + 2 * tm * Cp * 4          # output tile (f32)
            + R * tm * Hp * 4)         # per-relation f32 accumulators


def _pick_tiles(n, vmem_bytes_fn, *, tm_cap=512, tk_cap=2048, budget=_VMEM_BUDGET):
    """Pick (tm, tk) dividing n (n is a multiple of 128): prefer fitting the VMEM budget,
    then >=2 row steps (v7x megacore), then the largest tiles (amortize per-step overhead)."""
    tms = [t for t in range(8, min(n, tm_cap) + 1, 8) if n % t == 0] or [n]
    tks = [t for t in range(128, min(n, tk_cap) + 1, 128) if n % t == 0] or [n]
    best, best_key = None, None
    for tm in tms:
        for tk in tks:
            fits = vmem_bytes_fn(tm, tk) <= budget
            multi_row = (n // tm) >= 2
            key = (fits, multi_row, tm * tk, tm)
            if best_key is None or key > best_key:
                best_key, best = key, (tm, tk)
    return best


def _vmem_limit(footprint_bytes):
    return int(min(_VMEM_LIMIT_CEIL,
                   max(_VMEM_LIMIT_FLOOR, footprint_bytes * 5 // 4 + (2 << 20))))


# ----------------------------------------------------------------------------
# Pallas kernels
# ----------------------------------------------------------------------------
def _rgcn_layer1_kernel(adj_ref, w1_ref, root1_ref, h_ref, acc_ref):
    """acc += sum_r A_r_tile @ W1_r_tile; on last src step: h = relu(acc + (root1 + b1))."""
    k = pl.program_id(1)
    nrel = adj_ref.shape[0]

    @pl.when(k == 0)
    def _():
        acc_ref[...] = jnp.zeros_like(acc_ref)

    acc = acc_ref[...]
    for r in range(nrel):                                      # static unroll over relations
        acc = acc + jnp.dot(adj_ref[r], w1_ref[r],
                            preferred_element_type=jnp.float32)
    acc_ref[...] = acc

    @pl.when(k == pl.num_programs(1) - 1)
    def _():
        h_ref[...] = jnp.maximum(acc_ref[...] + root1_ref[...], 0.0).astype(h_ref.dtype)


def _rgcn_layer2_kernel(adj_ref, hsrc_ref, hdst_ref, w2cat_ref, b2_ref, o_ref, agg_ref,
                        *, num_valid):
    """agg_r += A_r_tile @ h_src; last src step: one bf16 [tm,(R+1)*Hp]@[(R+1)*Hp,Cp] matmul
    (+bias) followed by a fused, padding-aware log_softmax over the real classes."""
    k = pl.program_id(1)
    nrel = adj_ref.shape[0]

    @pl.when(k == 0)
    def _():
        agg_ref[...] = jnp.zeros_like(agg_ref)

    h_src = hsrc_ref[...]                                      # [tk, Hp] bf16
    for r in range(nrel):                                      # static unroll over relations
        agg_ref[r] = agg_ref[r] + jnp.dot(adj_ref[r], h_src,
                                          preferred_element_type=jnp.float32)

    @pl.when(k == pl.num_programs(1) - 1)
    def _():
        feats = [agg_ref[r].astype(jnp.bfloat16) for r in range(nrel)]
        feats.append(hdst_ref[...])                            # root-term operand (bf16)
        feats = jnp.concatenate(feats, axis=1)                 # [tm, (R+1)*Hp] bf16
        logits = (jnp.dot(feats, w2cat_ref[...],
                          preferred_element_type=jnp.float32)
                  + b2_ref[...])                               # [tm, Cp] f32

        # Fused, padding-aware log_softmax over the first `num_valid` (real) classes.
        col = jax.lax.broadcasted_iota(jnp.int32, logits.shape, 1)
        valid = col < num_valid
        logits = jnp.where(valid, logits, -1e30)               # safe only because logits are f32
        m = jnp.max(logits, axis=1, keepdims=True)
        s = logits - m
        e = jnp.where(valid, jnp.exp(s), 0.0)
        lse = jnp.log(jnp.sum(e, axis=1, keepdims=True))
        o_ref[...] = (s - lse).astype(o_ref.dtype)


# ----------------------------------------------------------------------------
# Pallas wrappers
# ----------------------------------------------------------------------------
def rgcn_layer1(adj_bf, w1p, root1b, *, tm, tk, vmem_limit):
    """adj_bf:[R,Np,Np] bf16  w1p:[R,Np,Hp] bf16  root1b:[Np,Hp] f32 -> h:[Np,Hp] bf16"""
    R, Np, _ = adj_bf.shape
    Hp = w1p.shape[2]
    return pl.pallas_call(
        _rgcn_layer1_kernel,
        out_shape=jax.ShapeDtypeStruct((Np, Hp), jnp.bfloat16),
        grid_spec=pltpu.PrefetchScalarGridSpec(
            num_scalar_prefetch=0,
            grid=(Np // tm, Np // tk),
            in_specs=[
                pl.BlockSpec((R, tm, tk), lambda i, k: (0, i, k)),
                pl.BlockSpec((R, tk, Hp), lambda i, k: (0, k, 0)),
                pl.BlockSpec((tm, Hp), lambda i, k: (i, 0)),
            ],
            out_specs=pl.BlockSpec((tm, Hp), lambda i, k: (i, 0)),
            scratch_shapes=[pltpu.VMEM((tm, Hp), jnp.float32)],
        ),
        compiler_params=pltpu.CompilerParams(
            dimension_semantics=("parallel", "arbitrary"),
            vmem_limit_bytes=vmem_limit),
    )(adj_bf, w1p, root1b)


def rgcn_layer2(adj_bf, h, w2cat, b2p, *, num_classes, tm, tk, vmem_limit):
    """adj_bf:[R,Np,Np] bf16  h:[Np,Hp] bf16  w2cat:[(R+1)*Hp,Cp] bf16  b2p:[1,Cp] f32
       -> log_softmax logits [Np,Cp] f32"""
    R, Np, _ = adj_bf.shape
    Hp = h.shape[1]
    Cp = b2p.shape[1]
    kernel = functools.partial(_rgcn_layer2_kernel, num_valid=num_classes)
    return pl.pallas_call(
        kernel,
        out_shape=jax.ShapeDtypeStruct((Np, Cp), jnp.float32),
        grid_spec=pltpu.PrefetchScalarGridSpec(
            num_scalar_prefetch=0,
            grid=(Np // tm, Np // tk),
            in_specs=[
                pl.BlockSpec((R, tm, tk), lambda i, k: (0, i, k)),   # adjacency (dst i, src k)
                pl.BlockSpec((tk, Hp), lambda i, k: (k, 0)),         # h at source rows
                pl.BlockSpec((tm, Hp), lambda i, k: (i, 0)),         # h at dst rows (root term)
                pl.BlockSpec(((R + 1) * Hp, Cp), lambda i, k: (0, 0)),
                pl.BlockSpec((1, Cp), lambda i, k: (0, 0)),
            ],
            out_specs=pl.BlockSpec((tm, Cp), lambda i, k: (i, 0)),
            scratch_shapes=[pltpu.VMEM((R, tm, Hp), jnp.float32)],
        ),
        compiler_params=pltpu.CompilerParams(
            dimension_semantics=("parallel", "arbitrary"),
            vmem_limit_bytes=vmem_limit),
    )(adj_bf, h, h, w2cat, b2p)


# ----------------------------------------------------------------------------
# Glue (plain JAX): normalized adjacency, parameter init, full forward
# ----------------------------------------------------------------------------
def build_norm_adj(edge_index, edge_type, num_nodes, num_relations, *,
                   padded_nodes=None, dtype=jnp.bfloat16):
    n = padded_nodes if padded_nodes is not None else num_nodes
    src, dst = edge_index[0], edge_index[1]
    counts = jnp.zeros((num_relations, n, n), jnp.float32)
    counts = counts.at[edge_type, dst, src].add(1.0)
    deg = jnp.sum(counts, axis=2, keepdims=True)            # per-(relation, dst) in-degree
    # normalize ('mean' aggregation) and cast in one fused pass -> no extra f32 copy in HBM
    return (counts / jnp.maximum(deg, 1.0)).astype(dtype)


def glorot(key, shape):
    fan_in, fan_out = shape[-2], shape[-1]
    limit = (6.0 / (fan_in + fan_out)) ** 0.5
    return jax.random.uniform(key, shape, jnp.float32, -limit, limit)


def init_rgcn_params(key, num_nodes, num_classes, num_relations, hidden):
    k1, k2, k3, k4 = jax.random.split(key, 4)
    return {
        "w1": glorot(k1, (num_relations, num_nodes, hidden)),
        "root1": glorot(k2, (num_nodes, hidden)),
        "b1": jnp.zeros((1, hidden), jnp.float32),
        "w2": glorot(k3, (num_relations, hidden, num_classes)),
        "root2": glorot(k4, (hidden, num_classes)),
        "b2": jnp.zeros((1, num_classes), jnp.float32),
    }


def rgcn_forward(params, edge_index, edge_type, *, num_nodes, num_relations):
    hidden = params["w1"].shape[2]
    num_classes = params["w2"].shape[2]
    R, N = num_relations, num_nodes
    Hp = _round_up(hidden, 128)                    # lane-dense hidden dim
    Cp = _round_up(num_classes, 128)               # lane-dense class dim
    Np = _round_up(N, 128)                         # node axis padded -> (8,128)-aligned tiles

    # Single adjacency layout shared by both layers (no transpose/reshape copy).
    adj_bf = build_norm_adj(edge_index, edge_type, N, R, padded_nodes=Np)   # [R,Np,Np] bf16

    # ---- layer 1 operands (identity-feature path folded away; b1 folded into root1) ----
    w1p = jnp.zeros((R, Np, Hp), jnp.bfloat16).at[:, :N, :hidden].set(
        params["w1"].astype(jnp.bfloat16))
    root1b = jnp.zeros((Np, Hp), jnp.float32).at[:N, :hidden].set(
        params["root1"] + params["b1"])

    tm1, tk1 = _pick_tiles(Np, lambda tm, tk: _layer1_vmem_bytes(tm, tk, R, Hp))
    h = rgcn_layer1(adj_bf, w1p, root1b, tm=tm1, tk=tk1,
                    vmem_limit=_vmem_limit(_layer1_vmem_bytes(tm1, tk1, R, Hp)))

    # ---- layer 2 operands (W2_r and root2 stacked along the contraction dim, bf16) ----
    w2p = jnp.zeros((R, Hp, Cp), jnp.float32).at[:, :hidden, :num_classes].set(params["w2"])
    root2p = jnp.zeros((Hp, Cp), jnp.float32).at[:hidden, :num_classes].set(params["root2"])
    w2cat = jnp.concatenate([w2p.reshape(R * Hp, Cp), root2p], axis=0).astype(jnp.bfloat16)
    b2p = jnp.zeros((1, Cp), jnp.float32).at[:, :num_classes].set(params["b2"])

    tm2, tk2 = _pick_tiles(Np, lambda tm, tk: _layer2_vmem_bytes(tm, tk, R, Hp, Cp))
    out_pad = rgcn_layer2(adj_bf, h, w2cat, b2p, num_classes=num_classes,
                          tm=tm2, tk=tk2,
                          vmem_limit=_vmem_limit(_layer2_vmem_bytes(tm2, tk2, R, Hp, Cp)))
    return out_pad[:N, :num_classes]


# ----------------------------------------------------------------------------
# Pure-JAX references used only to validate the Pallas kernels.
# ----------------------------------------------------------------------------
def _ref_forward(params, edge_index, edge_type, num_nodes, num_relations,
                 *, match_kernel_precision):
    adj = build_norm_adj(edge_index, edge_type, num_nodes, num_relations, dtype=jnp.float32)
    w1, root1, b1 = params["w1"], params["root1"], params["b1"]
    w2, root2, b2 = params["w2"], params["root2"], params["b2"]
    hi = jax.lax.Precision.HIGHEST

    def q(x):
        return x.astype(jnp.bfloat16).astype(jnp.float32)

    if match_kernel_precision:
        adj, w1 = q(adj), q(w1)
    h = jax.nn.relu(jnp.einsum("rvu,ruh->vh", adj, w1, precision=hi) + root1 + b1)
    if match_kernel_precision:
        h = q(h)
    agg = jnp.einsum("rvu,uh->rvh", adj, h, precision=hi)
    if match_kernel_precision:
        agg, w2, root2 = q(agg), q(w2), q(root2)
    o = (jnp.einsum("rvh,rhc->vc", agg, w2, precision=hi)
         + jnp.dot(h, root2, precision=hi) + b2)
    return jax.nn.log_softmax(o, axis=1)


# ----------------------------------------------------------------------------
if __name__ == "__main__":
    NUM_NODES = 32
    NUM_CLASSES = 8
    NUM_RELATIONS = 3
    HIDDEN = 32
    NUM_EDGES = 64

    key = jax.random.PRNGKey(0)
    k_src, k_dst, k_rel, k_params = jax.random.split(key, 4)

    src = jax.random.randint(k_src, (NUM_EDGES,), 0, NUM_NODES)
    dst = jax.random.randint(k_dst, (NUM_EDGES,), 0, NUM_NODES)
    edge_index = jnp.stack([src, dst], axis=0)                              # [2, E]
    edge_attr = jax.random.randint(k_rel, (NUM_EDGES,), 0, NUM_RELATIONS)   # [E]

    params = init_rgcn_params(k_params, NUM_NODES, NUM_CLASSES, NUM_RELATIONS, HIDDEN)

    fwd = jax.jit(functools.partial(rgcn_forward,
                                    num_nodes=NUM_NODES,
                                    num_relations=NUM_RELATIONS))
    out = jax.block_until_ready(fwd(params, edge_index, edge_attr))

    ref_matched = _ref_forward(params, edge_index, edge_attr, NUM_NODES, NUM_RELATIONS,
                               match_kernel_precision=True)
    ref_f32 = _ref_forward(params, edge_index, edge_attr, NUM_NODES, NUM_RELATIONS,
                           match_kernel_precision=False)

    assert out.shape == (NUM_NODES, NUM_CLASSES)
    assert jnp.allclose(out, ref_matched, atol=5e-3, rtol=5e-3), \
        "mismatch vs matched-precision (bf16-input) JAX reference"
    assert jnp.allclose(out, ref_f32, atol=1e-1, rtol=1e-1), \
        "mismatch vs full-f32 JAX reference"

    print("KERNEL_OK")
</pallas_src>

<mosaic_0001>
module attributes {stable_mosaic.version = 11 : i64} {
  func.func private @main(%arg0: i32) attributes {dimension_semantics = [#tpu.dimension_semantics<core_parallel>], iteration_bounds = array<i64: 2>, tpu.core_type = #tpu.core_type<sc_scalar_subcore>, window_params = []} {
    return
  }
}

module attributes {stable_mosaic.version = 11 : i64} {
  func.func private @main(%arg0: i32) attributes {dimension_semantics = [#tpu.dimension_semantics<core_parallel>], iteration_bounds = array<i64: 2>, tpu.core_type = #tpu.core_type<sc_scalar_subcore>, window_params = []} {
    return
  }
}

module attributes {stable_mosaic.version = 11 : i64} {
  func.func @_rgcn_layer1_kernel(%arg0: i32, %arg1: i32, %arg2: memref<3x64x128xbf16, #tpu.memory_space<vmem>>, %arg3: memref<3x128x128xbf16, #tpu.memory_space<vmem>>, %arg4: memref<64x128xf32, #tpu.memory_space<vmem>>, %arg5: memref<64x128xbf16, #tpu.memory_space<vmem>>, %arg6: memref<64x128xf32, #tpu.memory_space<vmem>>) attributes {dimension_semantics = [#tpu.dimension_semantics<parallel>, #tpu.dimension_semantics<arbitrary>], iteration_bounds = array<i64: 2, 1>, scalar_prefetch = 0 : i64, scratch_operands = 1 : i64, tpu.core_type = #tpu.core_type<tc>, window_params = [{transform_indices = @transform_0, window_bounds = array<i64: 3, 64, 128>}, {transform_indices = @transform_1, window_bounds = array<i64: 3, 128, 128>}, {transform_indices = @transform_2, window_bounds = array<i64: 64, 128>}, {transform_indices = @transform_3, window_bounds = array<i64: 64, 128>}]} {
    %c0_i32 = arith.constant 0 : i32
    %0 = arith.cmpi eq, %arg1, %c0_i32 : i32
    %1 = arith.extui %0 : i1 to i32
    %c0_i32_0 = arith.constant 0 : i32
    %2 = arith.cmpi ne, %1, %c0_i32_0 : i32
    scf.if %2 {
      %cst_24 = arith.constant 0.000000e+00 : f32
      %26 = vector.broadcast %cst_24 : f32 to vector<64x128xf32>
      %c0_25 = arith.constant 0 : index
      %c0_26 = arith.constant 0 : index
      %27 = vector.load %arg6[%c0_25, %c0_26] : memref<64x128xf32, #tpu.memory_space<vmem>>, vector<64x128xf32>
      tpu.vector_store %arg6[%c0_25, %c0_26], %26 {strides = array<i32>} : memref<64x128xf32, #tpu.memory_space<vmem>>, vector<64x128xf32>,
    } else {
    }
    %c0 = arith.constant 0 : index
    %c0_1 = arith.constant 0 : index
    %3 = vector.load %arg6[%c0, %c0_1] : memref<64x128xf32, #tpu.memory_space<vmem>>, vector<64x128xf32>
    %c0_2 = arith.constant 0 : index
    %c0_3 = arith.constant 0 : index
    %c0_4 = arith.constant 0 : index
    %4 = vector.load %arg2[%c0_2, %c0_3, %c0_4] : memref<3x64x128xbf16, #tpu.memory_space<vmem>>, vector<1x64x128xbf16>
    %5 = vector.shape_cast %4 : vector<1x64x128xbf16> to vector<64x128xbf16>
    %c0_5 = arith.constant 0 : index
    %c0_6 = arith.constant 0 : index
    %c0_7 = arith.constant 0 : index
    %6 = vector.load %arg3[%c0_5, %c0_6, %c0_7] : memref<3x128x128xbf16, #tpu.memory_space<vmem>>, vector<1x128x128xbf16>
    %7 = vector.shape_cast %6 : vector<1x128x128xbf16> to vector<128x128xbf16>
    %cst = arith.constant dense<0.000000e+00> : vector<64x128xf32>
    %8 = tpu.matmul %5, %7, %cst {dimension_numbers = #tpu.dot_dimension_numbers<[1], [0], [0], [1], [0, 0, 1, 1], [], []>} : vector<64x128xbf16>, vector<128x128xbf16>, vector<64x128xf32> -> vector<64x128xf32>
    %9 = arith.addf %3, %8 : vector<64x128xf32>
    %c1 = arith.constant 1 : index
    %c0_8 = arith.constant 0 : index
    %c0_9 = arith.constant 0 : index
    %10 = vector.load %arg2[%c1, %c0_8, %c0_9] : memref<3x64x128xbf16, #tpu.memory_space<vmem>>, vector<1x64x128xbf16>
    %11 = vector.shape_cast %10 : vector<1x64x128xbf16> to vector<64x128xbf16>
    %c1_10 = arith.constant 1 : index
    %c0_11 = arith.constant 0 : index
    %c0_12 = arith.constant 0 : index
    %12 = vector.load %arg3[%c1_10, %c0_11, %c0_12] : memref<3x128x128xbf16, #tpu.memory_space<vmem>>, vector<1x128x128xbf16>
    %13 = vector.shape_cast %12 : vector<1x128x128xbf16> to vector<128x128xbf16>
    %cst_13 = arith.constant dense<0.000000e+00> : vector<64x128xf32>
    %14 = tpu.matmul %11, %13, %cst_13 {dimension_numbers = #tpu.dot_dimension_numbers<[1], [0], [0], [1], [0, 0, 1, 1], [], []>} : vector<64x128xbf16>, vector<128x128xbf16>, vector<64x128xf32> -> vector<64x128xf32>
    %15 = arith.addf %9, %14 : vector<64x128xf32>
    %c2 = arith.constant 2 : index
    %c0_14 = arith.constant 0 : index
    %c0_15 = arith.constant 0 : index
    %16 = vector.load %arg2[%c2, %c0_14, %c0_15] : memref<3x64x128xbf16, #tpu.memory_space<vmem>>, vector<1x64x128xbf16>
    %17 = vector.shape_cast %16 : vector<1x64x128xbf16> to vector<64x128xbf16>
    %c2_16 = arith.constant 2 : index
    %c0_17 = arith.constant 0 : index
    %c0_18 = arith.constant 0 : index
    %18 = vector.load %arg3[%c2_16, %c0_17, %c0_18] : memref<3x128x128xbf16, #tpu.memory_space<vmem>>, vector<1x128x128xbf16>
    %19 = vector.shape_cast %18 : vector<1x128x128xbf16> to vector<128x128xbf16>
    %cst_19 = arith.constant dense<0.000000e+00> : vector<64x128xf32>
    %20 = tpu.matmul %17, %19, %cst_19 {dimension_numbers = #tpu.dot_dimension_numbers<[1], [0], [0], [1], [0, 0, 1, 1], [], []>} : vector<64x128xbf16>, vector<128x128xbf16>, vector<64x128xf32> -> vector<64x128xf32>
    %21 = arith.addf %15, %20 : vector<64x128xf32>
    %c0_20 = arith.constant 0 : index
    %c0_21 = arith.constant 0 : index
    %22 = vector.load %arg6[%c0_20, %c0_21] : memref<64x128xf32, #tpu.memory_space<vmem>>, vector<64x128xf32>
    tpu.vector_store %arg6[%c0_20, %c0_21], %21 {strides = array<i32>} : memref<64x128xf32, #tpu.memory_space<vmem>>, vector<64x128xf32>,
    %c0_i32_22 = arith.constant 0 : i32
    %23 = arith.cmpi eq, %arg1, %c0_i32_22 : i32
    %24 = arith.extui %23 : i1 to i32
    %c0_i32_23 = arith.constant 0 : i32
    %25 = arith.cmpi ne, %24, %c0_i32_23 : i32
    scf.if %25 {
      %c0_24 = arith.constant 0 : index
      %c0_25 = arith.constant 0 : index
      %26 = vector.load %arg6[%c0_24, %c0_25] : memref<64x128xf32, #tpu.memory_space<vmem>>, vector<64x128xf32>
      %c0_26 = arith.constant 0 : index
      %c0_27 = arith.constant 0 : index
      %27 = vector.load %arg4[%c0_26, %c0_27] : memref<64x128xf32, #tpu.memory_space<vmem>>, vector<64x128xf32>
      %28 = arith.addf %26, %27 : vector<64x128xf32>
      %cst_28 = arith.constant 0.000000e+00 : f32
      %29 = vector.broadcast %cst_28 : f32 to vector<64x128xf32>
      %30 = arith.maximumf %28, %29 : vector<64x128xf32>
      %31 = arith.truncf %30 : vector<64x128xf32> to vector<64x128xbf16>
      %c0_29 = arith.constant 0 : index
      %c0_30 = arith.constant 0 : index
      %32 = vector.load %arg5[%c0_29, %c0_30] : memref<64x128xbf16, #tpu.memory_space<vmem>>, vector<64x128xbf16>
      tpu.vector_store %arg5[%c0_29, %c0_30], %31 {strides = array<i32>} : memref<64x128xbf16, #tpu.memory_space<vmem>>, vector<64x128xbf16>,
    } else {
    }
    return
  }
  func.func @transform_0(%arg0: i32, %arg1: i32) -> (i32, i32, i32) {
    %c0_i32 = arith.constant 0 : i32
    %c0_i32_0 = arith.constant 0 : i32
    return %c0_i32, %arg0, %arg1 : i32, i32, i32
  }
  func.func @transform_1(%arg0: i32, %arg1: i32) -> (i32, i32, i32) {
    %c0_i32 = arith.constant 0 : i32
    %c0_i32_0 = arith.constant 0 : i32
    %c0_i32_1 = arith.constant 0 : i32
    return %c0_i32, %arg1, %c0_i32_0 : i32, i32, i32
  }
  func.func @transform_2(%arg0: i32, %arg1: i32) -> (i32, i32) {
    %c0_i32 = arith.constant 0 : i32
    %c0_i32_0 = arith.constant 0 : i32
    return %arg0, %c0_i32 : i32, i32
  }
  func.func @transform_3(%arg0: i32, %arg1: i32) -> (i32, i32) {
    %c0_i32 = arith.constant 0 : i32
    %c0_i32_0 = arith.constant 0 : i32
    return %arg0, %c0_i32 : i32, i32
  }
}

module attributes {stable_mosaic.version = 11 : i64} {
  func.func @_rgcn_layer2_kernel(%arg0: i32, %arg1: i32, %arg2: memref<3x64x128xbf16, #tpu.memory_space<vmem>>, %arg3: memref<128x128xbf16, #tpu.memory_space<vmem>>, %arg4: memref<64x128xbf16, #tpu.memory_space<vmem>>, %arg5: memref<512x128xbf16, #tpu.memory_space<vmem>>, %arg6: memref<1x128xf32, #tpu.memory_space<vmem>>, %arg7: memref<64x128xf32, #tpu.memory_space<vmem>>, %arg8: memref<3x64x128xf32, #tpu.memory_space<vmem>>) attributes {dimension_semantics = [#tpu.dimension_semantics<parallel>, #tpu.dimension_semantics<arbitrary>], iteration_bounds = array<i64: 2, 1>, scalar_prefetch = 0 : i64, scratch_operands = 1 : i64, tpu.core_type = #tpu.core_type<tc>, window_params = [{transform_indices = @transform_0, window_bounds = array<i64: 3, 64, 128>}, {transform_indices = @transform_1, window_bounds = array<i64: 128, 128>}, {transform_indices = @transform_2, window_bounds = array<i64: 64, 128>}, {pipeline_mode = #tpu.pipeline_mode<synchronous>, transform_indices = @transform_3, window_bounds = array<i64: 512, 128>}, {pipeline_mode = #tpu.pipeline_mode<synchronous>, transform_indices = @transform_4, window_bounds = array<i64: 1, 128>}, {transform_indices = @transform_5, window_bounds = array<i64: 64, 128>}]} {
    %c0_i32 = arith.constant 0 : i32
    %0 = arith.cmpi eq, %arg1, %c0_i32 : i32
    %1 = arith.extui %0 : i1 to i32
    %c0_i32_0 = arith.constant 0 : i32
    %2 = arith.cmpi ne, %1, %c0_i32_0 : i32
    scf.if %2 {
      %cst_31 = arith.constant 0.000000e+00 : f32
      %34 = vector.broadcast %cst_31 : f32 to vector<3x64x128xf32>
      %c0_32 = arith.constant 0 : index
      %c0_33 = arith.constant 0 : index
      %c0_34 = arith.constant 0 : index
      %35 = vector.load %arg8[%c0_32, %c0_33, %c0_34] : memref<3x64x128xf32, #tpu.memory_space<vmem>>, vector<3x64x128xf32>
      tpu.vector_store %arg8[%c0_32, %c0_33, %c0_34], %34 {strides = array<i32>} : memref<3x64x128xf32, #tpu.memory_space<vmem>>, vector<3x64x128xf32>,
    } else {
    }
    %c0 = arith.constant 0 : index
    %c0_1 = arith.constant 0 : index
    %3 = vector.load %arg3[%c0, %c0_1] : memref<128x128xbf16, #tpu.memory_space<vmem>>, vector<128x128xbf16>
    %c0_2 = arith.constant 0 : index
    %c0_3 = arith.constant 0 : index
    %c0_4 = arith.constant 0 : index
    %4 = vector.load %arg8[%c0_2, %c0_3, %c0_4] : memref<3x64x128xf32, #tpu.memory_space<vmem>>, vector<1x64x128xf32>
    %5 = vector.shape_cast %4 : vector<1x64x128xf32> to vector<64x128xf32>
    %c0_5 = arith.constant 0 : index
    %c0_6 = arith.constant 0 : index
    %c0_7 = arith.constant 0 : index
    %6 = vector.load %arg2[%c0_5, %c0_6, %c0_7] : memref<3x64x128xbf16, #tpu.memory_space<vmem>>, vector<1x64x128xbf16>
    %7 = vector.shape_cast %6 : vector<1x64x128xbf16> to vector<64x128xbf16>
    %cst = arith.constant dense<0.000000e+00> : vector<64x128xf32>
    %8 = tpu.matmul %7, %3, %cst {dimension_numbers = #tpu.dot_dimension_numbers<[1], [0], [0], [1], [0, 0, 1, 1], [], []>} : vector<64x128xbf16>, vector<128x128xbf16>, vector<64x128xf32> -> vector<64x128xf32>
    %9 = arith.addf %5, %8 : vector<64x128xf32>
    %c0_8 = arith.constant 0 : index
    %c0_9 = arith.constant 0 : index
    %c0_10 = arith.constant 0 : index
    %10 = vector.load %arg8[%c0_8, %c0_9, %c0_10] : memref<3x64x128xf32, #tpu.memory_space<vmem>>, vector<1x64x128xf32>
    %11 = vector.shape_cast %10 : vector<1x64x128xf32> to vector<64x128xf32>
    %12 = vector.shape_cast %9 : vector<64x128xf32> to vector<1x64x128xf32>
    tpu.vector_store %arg8[%c0_8, %c0_9, %c0_10], %12 {strides = array<i32>} : memref<3x64x128xf32, #tpu.memory_space<vmem>>, vector<1x64x128xf32>,
    %c1 = arith.constant 1 : index
    %c0_11 = arith.constant 0 : index
    %c0_12 = arith.constant 0 : index
    %13 = vector.load %arg8[%c1, %c0_11, %c0_12] : memref<3x64x128xf32, #tpu.memory_space<vmem>>, vector<1x64x128xf32>
    %14 = vector.shape_cast %13 : vector<1x64x128xf32> to vector<64x128xf32>
    %c1_13 = arith.constant 1 : index
    %c0_14 = arith.constant 0 : index
    %c0_15 = arith.constant 0 : index
    %15 = vector.load %arg2[%c1_13, %c0_14, %c0_15] : memref<3x64x128xbf16, #tpu.memory_space<vmem>>, vector<1x64x128xbf16>
    %16 = vector.shape_cast %15 : vector<1x64x128xbf16> to vector<64x128xbf16>
    %cst_16 = arith.constant dense<0.000000e+00> : vector<64x128xf32>
    %17 = tpu.matmul %16, %3, %cst_16 {dimension_numbers = #tpu.dot_dimension_numbers<[1], [0], [0], [1], [0, 0, 1, 1], [], []>} : vector<64x128xbf16>, vector<128x128xbf16>, vector<64x128xf32> -> vector<64x128xf32>
    %18 = arith.addf %14, %17 : vector<64x128xf32>
    %c1_17 = arith.constant 1 : index
    %c0_18 = arith.constant 0 : index
    %c0_19 = arith.constant 0 : index
    %19 = vector.load %arg8[%c1_17, %c0_18, %c0_19] : memref<3x64x128xf32, #tpu.memory_space<vmem>>, vector<1x64x128xf32>
    %20 = vector.shape_cast %19 : vector<1x64x128xf32> to vector<64x128xf32>
    %21 = vector.shape_cast %18 : vector<64x128xf32> to vector<1x64x128xf32>
    tpu.vector_store %arg8[%c1_17, %c0_18, %c0_19], %21 {strides = array<i32>} : memref<3x64x128xf32, #tpu.memory_space<vmem>>, vector<1x64x128xf32>,
    %c2 = arith.constant 2 : index
    %c0_20 = arith.constant 0 : index
    %c0_21 = arith.constant 0 : index
    %22 = vector.load %arg8[%c2, %c0_20, %c0_21] : memref<3x64x128xf32, #tpu.memory_space<vmem>>, vector<1x64x128xf32>
    %23 = vector.shape_cast %22 : vector<1x64x128xf32> to vector<64x128xf32>
    %c2_22 = arith.constant 2 : index
    %c0_23 = arith.constant 0 : index
    %c0_24 = arith.constant 0 : index
    %24 = vector.load %arg2[%c2_22, %c0_23, %c0_24] : memref<3x64x128xbf16, #tpu.memory_space<vmem>>, vector<1x64x128xbf16>
    %25 = vector.shape_cast %24 : vector<1x64x128xbf16> to vector<64x128xbf16>
    %cst_25 = arith.constant dense<0.000000e+00> : vector<64x128xf32>
    %26 = tpu.matmul %25, %3, %cst_25 {dimension_numbers = #tpu.dot_dimension_numbers<[1], [0], [0], [1], [0, 0, 1, 1], [], []>} : vector<64x128xbf16>, vector<128x128xbf16>, vector<64x128xf32> -> vector<64x128xf32>
    %27 = arith.addf %23, %26 : vector<64x128xf32>
    %c2_26 = arith.constant 2 : index
    %c0_27 = arith.constant 0 : index
    %c0_28 = arith.constant 0 : index
    %28 = vector.load %arg8[%c2_26, %c0_27, %c0_28] : memref<3x64x128xf32, #tpu.memory_space<vmem>>, vector<1x64x128xf32>
    %29 = vector.shape_cast %28 : vector<1x64x128xf32> to vector<64x128xf32>
    %30 = vector.shape_cast %27 : vector<64x128xf32> to vector<1x64x128xf32>
    tpu.vector_store %arg8[%c2_26, %c0_27, %c0_28], %30 {strides = array<i32>} : memref<3x64x128xf32, #tpu.memory_space<vmem>>, vector<1x64x128xf32>,
    %c0_i32_29 = arith.constant 0 : i32
    %31 = arith.cmpi eq, %arg1, %c0_i32_29 : i32
    %32 = arith.extui %31 : i1 to i32
    %c0_i32_30 = arith.constant 0 : i32
    %33 = arith.cmpi ne, %32, %c0_i32_30 : i32
    scf.if %33 {
      %c0_31 = arith.constant 0 : index
      %c0_32 = arith.constant 0 : index
      %c0_33 = arith.constant 0 : index
      %34 = vector.load %arg8[%c0_31, %c0_32, %c0_33] : memref<3x64x128xf32, #tpu.memory_space<vmem>>, vector<1x64x128xf32>
      %35 = vector.shape_cast %34 : vector<1x64x128xf32> to vector<64x128xf32>
      %36 = arith.truncf %35 : vector<64x128xf32> to vector<64x128xbf16>
      %c1_34 = arith.constant 1 : index
      %c0_35 = arith.constant 0 : index
      %c0_36 = arith.constant 0 : index
      %37 = vector.load %arg8[%c1_34, %c0_35, %c0_36] : memref<3x64x128xf32, #tpu.memory_space<vmem>>, vector<1x64x128xf32>
      %38 = vector.shape_cast %37 : vector<1x64x128xf32> to vector<64x128xf32>
      %39 = arith.truncf %38 : vector<64x128xf32> to vector<64x128xbf16>
      %c2_37 = arith.constant 2 : index
      %c0_38 = arith.constant 0 : index
      %c0_39 = arith.constant 0 : index
      %40 = vector.load %arg8[%c2_37, %c0_38, %c0_39] : memref<3x64x128xf32, #tpu.memory_space<vmem>>, vector<1x64x128xf32>
      %41 = vector.shape_cast %40 : vector<1x64x128xf32> to vector<64x128xf32>
      %42 = arith.truncf %41 : vector<64x128xf32> to vector<64x128xbf16>
      %c0_40 = arith.constant 0 : index
      %c0_41 = arith.constant 0 : index
      %43 = vector.load %arg4[%c0_40, %c0_41] : memref<64x128xbf16, #tpu.memory_space<vmem>>, vector<64x128xbf16>
      %44 = tpu.concatenate %36, %39, %42, %43 in 1 : vector<64x128xbf16>, vector<64x128xbf16>, vector<64x128xbf16>, vector<64x128xbf16> -> vector<64x512xbf16>
      %c0_42 = arith.constant 0 : index
      %c0_43 = arith.constant 0 : index
      %45 = vector.load %arg5[%c0_42, %c0_43] : memref<512x128xbf16, #tpu.memory_space<vmem>>, vector<512x128xbf16>
      %cst_44 = arith.constant dense<0.000000e+00> : vector<64x128xf32>
      %46 = tpu.matmul %44, %45, %cst_44 {dimension_numbers = #tpu.dot_dimension_numbers<[1], [0], [0], [1], [0, 0, 1, 1], [], []>} : vector<64x512xbf16>, vector<512x128xbf16>, vector<64x128xf32> -> vector<64x128xf32>
      %c0_45 = arith.constant 0 : index
      %c0_46 = arith.constant 0 : index
      %47 = vector.load %arg6[%c0_45, %c0_46] : memref<1x128xf32, #tpu.memory_space<vmem>>, vector<1x128xf32>
      %48 = vector.broadcast %47 : vector<1x128xf32> to vector<64x128xf32>
      %49 = arith.addf %46, %48 : vector<64x128xf32>
      %50 = tpu.iota {dimensions = array<i32: 1>} : vector<64x128xi32>
      %c8_i32 = arith.constant 8 : i32
      %51 = vector.broadcast %c8_i32 : i32 to vector<64x128xi32>
      %52 = arith.cmpi slt, %50, %51 : vector<64x128xi32>
      %cst_47 = arith.constant -1.000000e+30 : f32
      %53 = vector.broadcast %cst_47 : f32 to vector<64x128xf32>
      %54 = arith.select %52, %49, %53 : vector<64x128xi1>, vector<64x128xf32>
      %cst_48 = arith.constant dense<0xFF800000> : vector<64xf32>
      %55 = vector.multi_reduction <maximumf>, %54, %cst_48 [1] : vector<64x128xf32> to vector<64xf32>
      %56 = vector.shape_cast %55 : vector<64xf32> to vector<64x1xf32>
      %57 = vector.broadcast %56 : vector<64x1xf32> to vector<64x128xf32>
      %58 = arith.subf %54, %57 : vector<64x128xf32>
      %59 = math.exp %58 : vector<64x128xf32>
      %cst_49 = arith.constant 0.000000e+00 : f32
      %60 = vector.broadcast %cst_49 : f32 to vector<64x128xf32>
      %61 = arith.select %52, %59, %60 : vector<64x128xi1>, vector<64x128xf32>
      %cst_50 = arith.constant dense<0.000000e+00> : vector<64xf32>
      %62 = vector.multi_reduction <add>, %61, %cst_50 [1] : vector<64x128xf32> to vector<64xf32>
      %63 = vector.shape_cast %62 : vector<64xf32> to vector<64x1xf32>
      %64 = math.log %63 : vector<64x1xf32>
      %65 = vector.broadcast %64 : vector<64x1xf32> to vector<64x128xf32>
      %66 = arith.subf %58, %65 : vector<64x128xf32>
      %c0_51 = arith.constant 0 : index
      %c0_52 = arith.constant 0 : index
      %67 = vector.load %arg7[%c0_51, %c0_52] : memref<64x128xf32, #tpu.memory_space<vmem>>, vector<64x128xf32>
      tpu.vector_store %arg7[%c0_51, %c0_52], %66 {strides = array<i32>} : memref<64x128xf32, #tpu.memory_space<vmem>>, vector<64x128xf32>,
    } else {
    }
    return
  }
  func.func @transform_0(%arg0: i32, %arg1: i32) -> (i32, i32, i32) {
    %c0_i32 = arith.constant 0 : i32
    %c0_i32_0 = arith.constant 0 : i32
    return %c0_i32, %arg0, %arg1 : i32, i32, i32
  }
  func.func @transform_1(%arg0: i32, %arg1: i32) -> (i32, i32) {
    %c0_i32 = arith.constant 0 : i32
    %c0_i32_0 = arith.constant 0 : i32
    return %arg1, %c0_i32 : i32, i32
  }
  func.func @transform_2(%arg0: i32, %arg1: i32) -> (i32, i32) {
    %c0_i32 = arith.constant 0 : i32
    %c0_i32_0 = arith.constant 0 : i32
    return %arg0, %c0_i32 : i32, i32
  }
  func.func @transform_3(%arg0: i32, %arg1: i32) -> (i32, i32) {
    %c0_i32 = arith.constant 0 : i32
    %c0_i32_0 = arith.constant 0 : i32
    %c0_i32_1 = arith.constant 0 : i32
    return %c0_i32, %c0_i32_0 : i32, i32
  }
  func.func @transform_4(%arg0: i32, %arg1: i32) -> (i32, i32) {
    %c0_i32 = arith.constant 0 : i32
    %c0_i32_0 = arith.constant 0 : i32
    %c0_i32_1 = arith.constant 0 : i32
    return %c0_i32, %c0_i32_0 : i32, i32
  }
  func.func @transform_5(%arg0: i32, %arg1: i32) -> (i32, i32) {
    %c0_i32 = arith.constant 0 : i32
    %c0_i32_0 = arith.constant 0 : i32
    return %arg0, %c0_i32 : i32, i32
  }
}

</mosaic_0001>

<llo_original>
// kernel: rgcn_forward.2
$region0: #{rgcn_forward.2}
  #allocation0 [shape = 'u32[]', space=smem, size = 0x4, offset = 0x4, fixed_abs, tag = 'smem constant byte address 0x4 - core index']
  #allocation1 [shape = 'u32[144,128]{1,0:T(1,128)}', space=vmem, size = 0x12000, scoped, tag = 'internal scratch']
  #allocation2 [shape = 'f32[64,128]{1,0:T(8,128)}', space=vmem, size = 0x8000, scoped, tag = 'scratch operand']
  %s0 = inlined_call_operand.vmem [shape: bf16[3,128,128], index: 0, kind: input, shape index: {}]
  %s1 = inlined_call_operand.vmem [shape: bf16[3,128,128], index: 1, kind: input, shape index: {}]
  %s2 = inlined_call_operand.vmem [shape: f32[128,128], index: 2, kind: input, shape index: {}]
  %s3 = inlined_call_operand.vmem [shape: bf16[128,128], index: 3, kind: output, shape index: {}]
  %s4 = sld [smem:[#allocation0]]
  $region94: #{rgcn_forward.2} parent=0
    _
  %s6 = ssub.s32 1, %s4
  %s7 = scalar_select 0, %s6, %s4
  $region1: #{rgcn_forward.2} parent=0
    #allocation3 [shape = 'u8[98304]{0}', space=vmem, size = 0x18000, scoped, tag = 'input window, operand 0']
    loop: start=0, step=1, limit=4
    $region2: #{rgcn_forward.2} parent=1 // loop_pre_header
      _
    $region3: #{rgcn_forward.2} parent=1 // loop_header
      %s9 = sphi 0, %s13
      %p10 = scmp.ge.s32.totalorder %s9, 4
      %s16 = sphi 0, %s28
      %s17 = sphi 0, %s24
      %s18 = sphi 0, %s16
      %s19 = sphi 0, %s17
      %s20 = sphi 0, %s18
      %s21 = sphi 0, %s19
      %s33 = sphi 0, %s35
      %s36 = sphi 0, %s33
      %s37 = sphi 0, %s36
      %s53 = sphi 0, %s37
      %s59 = sphi 0, %s61
      %s62 = sphi 0, %s59
      %s63 = sphi 0, %s62
      %s79 = sphi 0, %s63
      %s85 = sphi 0, %s87
      %s88 = sphi 0, %s85
      %s89 = sphi 0, %s88
      %s105 = sphi 0, %s89
      %s111 = sphi 0, %s113
      %s114 = sphi 0, %s111
      %s115 = sphi 0, %s114
      %s131 = sphi 0, %s115
    $region4: #{rgcn_forward.2} parent=1 // loop_header_branch
      %12 = sbr.rel (%p10) target = $region8
    $region5: #{rgcn_forward.2} parent=1 // loop_body
      %s14 = ssub.s32 %s9, 1
      %s15 = ssub.s32 %s9, 2
      %s22 = sadd.s32 1, %s17
      %p23 = scmp.ge.s32.totalorder %s22, 1
      %s24 = scalar_select %p23, 0, %s22
      %s25 = sadd.s32 1, %s16
      %s26 = scalar_select %p23, %s25, %s16
      %p27 = scmp.ge.s32.totalorder %s26, 2
      %s28 = scalar_select %p27, 0, %s26
      %s29 = ssub.s32 %s16, %s28
      %s30 = ssub.s32 %s17, %s24
      %s31 = sor.u32 %s29, %s30
      %p32 = scmp.eq.s32.totalorder %s31, 0
      %s34 = sadd.s32 %s33, 1
      %s35 = scalar_select %p32, %s33, %s34
      %p38 = pneg %p32
      %p39 = scmp.eq.s32.totalorder %s9, 1
      %p40 = por %p38, %p39
      %p41 = scmp.ne.s32.totalorder %s33, %s36
      %p42 = scmp.eq.s32.totalorder %s9, 0
      %p43 = por %p41, %p42
      %p44 = scmp.ne.s32.totalorder %s33, %s36
      %p45 = scmp.eq.s32.totalorder %s14, 1
      %p46 = por %p44, %p45
      %p47 = scmp.ne.s32.totalorder %s36, %s37
      %p48 = scmp.eq.s32.totalorder %s14, 0
      %p49 = por %p47, %p48
      %p50 = scmp.ne.s32.totalorder %s36, %s37
      %p51 = scmp.eq.s32.totalorder %s15, 1
      %p52 = por %p50, %p51
      %p54 = scmp.ne.s32.totalorder %s37, %s53
      %p55 = scmp.eq.s32.totalorder %s15, 0
      %p56 = por %p54, %p55
      %s57 = ssub.s32 %s17, %s24
      %p58 = scmp.eq.s32.totalorder %s57, 0
      %s60 = sadd.s32 %s59, 1
      %s61 = scalar_select %p58, %s59, %s60
      %p64 = pneg %p58
      %p65 = scmp.eq.s32.totalorder %s9, 1
      %p66 = por %p64, %p65
      %p67 = scmp.ne.s32.totalorder %s59, %s62
      %p68 = scmp.eq.s32.totalorder %s9, 0
      %p69 = por %p67, %p68
      %p70 = scmp.ne.s32.totalorder %s59, %s62
      %p71 = scmp.eq.s32.totalorder %s14, 1
      %p72 = por %p70, %p71
      %p73 = scmp.ne.s32.totalorder %s62, %s63
      %p74 = scmp.eq.s32.totalorder %s14, 0
      %p75 = por %p73, %p74
      %p76 = scmp.ne.s32.totalorder %s62, %s63
      %p77 = scmp.eq.s32.totalorder %s15, 1
      %p78 = por %p76, %p77
      %p80 = scmp.ne.s32.totalorder %s63, %s79
      %p81 = scmp.eq.s32.totalorder %s15, 0
      %p82 = por %p80, %p81
      %s83 = ssub.s32 %s16, %s28
      %p84 = scmp.eq.s32.totalorder %s83, 0
      %s86 = sadd.s32 %s85, 1
      %s87 = scalar_select %p84, %s85, %s86
      %p90 = pneg %p84
      %p91 = scmp.eq.s32.totalorder %s9, 1
      %p92 = por %p90, %p91
      %p93 = scmp.ne.s32.totalorder %s85, %s88
      %p94 = scmp.eq.s32.totalorder %s9, 0
      %p95 = por %p93, %p94
      %p96 = scmp.ne.s32.totalorder %s85, %s88
      %p97 = scmp.eq.s32.totalorder %s14, 1
      %p98 = por %p96, %p97
      %p99 = scmp.ne.s32.totalorder %s88, %s89
      %p100 = scmp.eq.s32.totalorder %s14, 0
      %p101 = por %p99, %p100
      %p102 = scmp.ne.s32.totalorder %s88, %s89
      %p103 = scmp.eq.s32.totalorder %s15, 1
      %p104 = por %p102, %p103
      %p106 = scmp.ne.s32.totalorder %s89, %s105
      %p107 = scmp.eq.s32.totalorder %s15, 0
      %p108 = por %p106, %p107
      %s109 = ssub.s32 %s16, %s28
      %p110 = scmp.eq.s32.totalorder %s109, 0
      %s112 = sadd.s32 %s111, 1
      %s113 = scalar_select %p110, %s111, %s112
      %p116 = pneg %p110
      %p117 = scmp.eq.s32.totalorder %s9, 1
      %p118 = por %p116, %p117
      %p119 = scmp.ne.s32.totalorder %s111, %s114
      %p120 = scmp.eq.s32.totalorder %s9, 0
      %p121 = por %p119, %p120
      %p122 = scmp.ne.s32.totalorder %s111, %s114
      %p123 = scmp.eq.s32.totalorder %s14, 1
      %p124 = por %p122, %p123
      %p125 = scmp.ne.s32.totalorder %s114, %s115
      %p126 = scmp.eq.s32.totalorder %s14, 0
      %p127 = por %p125, %p126
      %p128 = scmp.ne.s32.totalorder %s114, %s115
      %p129 = scmp.eq.s32.totalorder %s15, 1
      %p130 = por %p128, %p129
      %p132 = scmp.ne.s32.totalorder %s115, %s131
      %p133 = scmp.eq.s32.totalorder %s15, 0
      %p134 = por %p132, %p133
      %p135 = scmp.le.s32.totalorder 1, %s9
      %p136 = scmp.lt.s32.totalorder %s9, 3
      %p137 = pnand %p135, %p136
      %p138 = pneg %p137
      // Predicated region
      $region9: #{rgcn_forward.2} parent=5 // pred_check
        _
      $region10: #{rgcn_forward.2} parent=5 // pred_check_branch
        %140 = sbr.rel (%p137) target = $region12
      $region11: #{rgcn_forward.2} parent=5 // pred_region
        %s141 = ssub.s32 %s9, 1
        // Predicated region
        $region13: #{rgcn_forward.2} parent=11 // pred_check
          %p142 = pneg %p75
        $region14: #{rgcn_forward.2} parent=11 // pred_check_branch
          %144 = sbr.rel (%p142) target = $region16
        $region15: #{rgcn_forward.2} parent=11 // pred_region
          %s145 = smul.u32 16, %s19
          %p146 = scmp.lt.s32.totalorder %s145, 15
          %s147 = scalar_select %p146, %s145, 15
          %s148 = smul.addr %s147, 4
          %s149 = scalar_lea.vmem %s1, %s148
          %s150 = smul.u32 16, %s19
        $region16: #{rgcn_forward.2} parent=11 // pred_fallthru
          _
      $region12: #{rgcn_forward.2} parent=5 // pred_fallthru
        _
      %p151 = scmp.lt.s32.totalorder %s9, 2
      // Predicated region
      $region17: #{rgcn_forward.2} parent=5 // pred_check
        %p152 = pneg %p151
      $region18: #{rgcn_forward.2} parent=5 // pred_check_branch
        %154 = sbr.rel (%p152) target = $region20
      $region19: #{rgcn_forward.2} parent=5 // pred_region
        // Predicated region
        $region21: #{rgcn_forward.2} parent=19 // pred_check
          %p155 = pneg %p43
        $region22: #{rgcn_forward.2} parent=19 // pred_check_branch
          %157 = sbr.rel (%p155) target = $region24
        $region23: #{rgcn_forward.2} parent=19 // pred_region
          %s158 = sand.u32 %s33, 1
          %s159 = sand.u32 %s33, 1
          %s160 = smul.addr %s159, 96
          %s161 = scalar_lea.vmem [#allocation3], %s160
          %s162 = smul.u32 8, %s16
          %s163 = sadd.s32 %s17, %s162
          %s164 = smul.addr %s163, 4
          %s165 = scalar_lea.vmem %s0, %s164
          // Predicated region
          $region25: #{rgcn_forward.2} parent=23 // pred_check
            _
          $region26: #{rgcn_forward.2} parent=23 // pred_check_branch
            %167 = sbr.rel (0) target = $region28
          $region27: #{rgcn_forward.2} parent=23 // pred_region
            // Predicated region
            $region29: #{rgcn_forward.2} parent=27 // pred_check
              _
            $region30: #{rgcn_forward.2} parent=27 // pred_check_branch
              %169 = sbr.rel target = $region32
            $region31: #{rgcn_forward.2} parent=27 // pred_region
              // Predicated region
              $region44: #{rgcn_forward.2} parent=31 // pred_check
                _
              $region45: #{rgcn_forward.2} parent=31 // pred_check_branch
                %230 = sbr.rel (0) target = $region47
              $region46: #{rgcn_forward.2} parent=31 // pred_region
                loop: start=0, step=1, limit=1
                $region48: #{rgcn_forward.2} parent=46 // loop_pre_header
                  _
                $region49: #{rgcn_forward.2} parent=46 // loop_header
                  %s232 = sphi 0, %s236
                  %p233 = scmp.ge.s32.totalorder %s232, 1
                  %s237 = sphi %s165, %s165
                  %s238 = sphi %s161, %s161
                $region50: #{rgcn_forward.2} parent=46 // loop_header_branch
                  %235 = sbr.rel (%p233) target = $region54
                $region51: #{rgcn_forward.2} parent=46 // loop_body
                  _
                $region52: #{rgcn_forward.2} parent=46 // loop_footer
                  %s236 = sadd.s32 1, %s232
                $region53: #{rgcn_forward.2} parent=46 // loop_footer_branch
                  %231 = sbr.rel target = $region49
                $region54: #{rgcn_forward.2} parent=46 // loop_exit
                  _
                loop: start=0, step=1, limit=1
                $region55: #{rgcn_forward.2} parent=46 // loop_pre_header
                  _
                $region56: #{rgcn_forward.2} parent=46 // loop_header
                  %s241 = sphi 0, %s245
                  %p242 = scmp.ge.s32.totalorder %s241, 1
                  %s246 = sphi %s165, %s165
                  %s247 = sphi %s161, %s161
                $region57: #{rgcn_forward.2} parent=46 // loop_header_branch
                  %244 = sbr.rel (%p242) target = $region61
                $region58: #{rgcn_forward.2} parent=46 // loop_body
                  %v248 = vld [vmem:[%s246] sm:$0xf]
                  %249 = vst [vmem:[%s247] sm:$0xf] %v248
                  %v250 = vld [vmem:[%s246 + $0x4] sm:$0xf]
                  %251 = vst [vmem:[%s247 + $0x4] sm:$0xf] %v250
                  %v252 = vld [vmem:[%s246 + $0x8] sm:$0xf]
                  %253 = vst [vmem:[%s247 + $0x8] sm:$0xf] %v252
                  %v254 = vld [vmem:[%s246 + $0xc] sm:$0xf]
                  %255 = vst [vmem:[%s247 + $0xc] sm:$0xf] %v254
                  %v256 = vld [vmem:[%s246 + $0x10] sm:$0xf]
                  %257 = vst [vmem:[%s247 + $0x10] sm:$0xf] %v256
                  %v258 = vld [vmem:[%s246 + $0x14] sm:$0xf]
                  %259 = vst [vmem:[%s247 + $0x14] sm:$0xf] %v258
                  %v260 = vld [vmem:[%s246 + $0x18] sm:$0xf]
                  %261 = vst [vmem:[%s247 + $0x18] sm:$0xf] %v260
                  %v262 = vld [vmem:[%s246 + $0x1c] sm:$0xf]
                  %263 = vst [vmem:[%s247 + $0x1c] sm:$0xf] %v262
                  %v264 = vld [vmem:[%s246 + $0x40] sm:$0xf]
                  %265 = vst [vmem:[%s247 + $0x20] sm:$0xf] %v264
                  %v266 = vld [vmem:[%s246 + $0x44] sm:$0xf]
                  %267 = vst [vmem:[%s247 + $0x24] sm:$0xf] %v266
                  %v268 = vld [vmem:[%s246 + $0x48] sm:$0xf]
                  %269 = vst [vmem:[%s247 + $0x28] sm:$0xf] %v268
                  %v270 = vld [vmem:[%s246 + $0x4c] sm:$0xf]
                  %271 = vst [vmem:[%s247 + $0x2c] sm:$0xf] %v270
                  %v272 = vld [vmem:[%s246 + $0x50] sm:$0xf]
                  %273 = vst [vmem:[%s247 + $0x30] sm:$0xf] %v272
                  %v274 = vld [vmem:[%s246 + $0x54] sm:$0xf]
                  %275 = vst [vmem:[%s247 + $0x34] sm:$0xf] %v274
                  %v276 = vld [vmem:[%s246 + $0x58] sm:$0xf]
                  %277 = vst [vmem:[%s247 + $0x38] sm:$0xf] %v276
                  %v278 = vld [vmem:[%s246 + $0x5c] sm:$0xf]
                  %279 = vst [vmem:[%s247 + $0x3c] sm:$0xf] %v278
                  %v280 = vld [vmem:[%s246 + $0x80] sm:$0xf]
                  %281 = vst [vmem:[%s247 + $0x40] sm:$0xf] %v280
                  %v282 = vld [vmem:[%s246 + $0x84] sm:$0xf]
                  %283 = vst [vmem:[%s247 + $0x44] sm:$0xf] %v282
                  %v284 = vld [vmem:[%s246 + $0x88] sm:$0xf]
                  %285 = vst [vmem:[%s247 + $0x48] sm:$0xf] %v284
                  %v286 = vld [vmem:[%s246 + $0x8c] sm:$0xf]
                  %287 = vst [vmem:[%s247 + $0x4c] sm:$0xf] %v286
                  %v288 = vld [vmem:[%s246 + $0x90] sm:$0xf]
                  %289 = vst [vmem:[%s247 + $0x50] sm:$0xf] %v288
                  %v290 = vld [vmem:[%s246 + $0x94] sm:$0xf]
                  %291 = vst [vmem:[%s247 + $0x54] sm:$0xf] %v290
                  %v292 = vld [vmem:[%s246 + $0x98] sm:$0xf]
                  %293 = vst [vmem:[%s247 + $0x58] sm:$0xf] %v292
                  %v294 = vld [vmem:[%s246 + $0x9c] sm:$0xf]
                  %295 = vst [vmem:[%s247 + $0x5c] sm:$0xf] %v294
                $region59: #{rgcn_forward.2} parent=46 // loop_footer
                  %s245 = sadd.s32 1, %s241
                $region60: #{rgcn_forward.2} parent=46 // loop_footer_branch
                  %240 = sbr.rel target = $region56
                $region61: #{rgcn_forward.2} parent=46 // loop_exit
                  _
              $region47: #{rgcn_forward.2} parent=31 // pred_fallthru
                _
            $region32: #{rgcn_forward.2} parent=27 // pred_fallthru
              _
            // Predicated region
            $region33: #{rgcn_forward.2} parent=27 // pred_check
              _
            $region34: #{rgcn_forward.2} parent=27 // pred_check_branch
              %171 = sbr.rel (0) target = $region36
            $region35: #{rgcn_forward.2} parent=27 // pred_region
              loop: start=0, step=1, limit=1
              $region37: #{rgcn_forward.2} parent=35 // loop_pre_header
                _
              $region38: #{rgcn_forward.2} parent=35 // loop_header
                %s174 = sphi 0, %s178
                %p175 = scmp.ge.s32.totalorder %s174, 1
                %s179 = sphi %s165, %s165
                %s180 = sphi %s161, %s161
              $region39: #{rgcn_forward.2} parent=35 // loop_header_branch
                %177 = sbr.rel (%p175) target = $region43
              $region40: #{rgcn_forward.2} parent=35 // loop_body
                %v181 = vld [vmem:[%s179] sm:$0xf]
                %182 = vst [vmem:[%s180] sm:$0xf] %v181
                %v183 = vld [vmem:[%s179 + $0x4] sm:$0xf]
                %184 = vst [vmem:[%s180 + $0x4] sm:$0xf] %v183
                %v185 = vld [vmem:[%s179 + $0x8] sm:$0xf]
                %186 = vst [vmem:[%s180 + $0x8] sm:$0xf] %v185
                %v187 = vld [vmem:[%s179 + $0xc] sm:$0xf]
                %188 = vst [vmem:[%s180 + $0xc] sm:$0xf] %v187
                %v189 = vld [vmem:[%s179 + $0x10] sm:$0xf]
                %190 = vst [vmem:[%s180 + $0x10] sm:$0xf] %v189
                %v191 = vld [vmem:[%s179 + $0x14] sm:$0xf]
                %192 = vst [vmem:[%s180 + $0x14] sm:$0xf] %v191
                %v193 = vld [vmem:[%s179 + $0x18] sm:$0xf]
                %194 = vst [vmem:[%s180 + $0x18] sm:$0xf] %v193
                %v195 = vld [vmem:[%s179 + $0x1c] sm:$0xf]
                %196 = vst [vmem:[%s180 + $0x1c] sm:$0xf] %v195
                %v197 = vld [vmem:[%s179 + $0x40] sm:$0xf]
                %198 = vst [vmem:[%s180 + $0x20] sm:$0xf] %v197
                %v199 = vld [vmem:[%s179 + $0x44] sm:$0xf]
                %200 = vst [vmem:[%s180 + $0x24] sm:$0xf] %v199
                %v201 = vld [vmem:[%s179 + $0x48] sm:$0xf]
                %202 = vst [vmem:[%s180 + $0x28] sm:$0xf] %v201
                %v203 = vld [vmem:[%s179 + $0x4c] sm:$0xf]
                %204 = vst [vmem:[%s180 + $0x2c] sm:$0xf] %v203
                %v205 = vld [vmem:[%s179 + $0x50] sm:$0xf]
                %206 = vst [vmem:[%s180 + $0x30] sm:$0xf] %v205
                %v207 = vld [vmem:[%s179 + $0x54] sm:$0xf]
                %208 = vst [vmem:[%s180 + $0x34] sm:$0xf] %v207
                %v209 = vld [vmem:[%s179 + $0x58] sm:$0xf]
                %210 = vst [vmem:[%s180 + $0x38] sm:$0xf] %v209
                %v211 = vld [vmem:[%s179 + $0x5c] sm:$0xf]
                %212 = vst [vmem:[%s180 + $0x3c] sm:$0xf] %v211
                %v213 = vld [vmem:[%s179 + $0x80] sm:$0xf]
                %214 = vst [vmem:[%s180 + $0x40] sm:$0xf] %v213
                %v215 = vld [vmem:[%s179 + $0x84] sm:$0xf]
                %216 = vst [vmem:[%s180 + $0x44] sm:$0xf] %v215
                %v217 = vld [vmem:[%s179 + $0x88] sm:$0xf]
                %218 = vst [vmem:[%s180 + $0x48] sm:$0xf] %v217
                %v219 = vld [vmem:[%s179 + $0x8c] sm:$0xf]
                %220 = vst [vmem:[%s180 + $0x4c] sm:$0xf] %v219
                %v221 = vld [vmem:[%s179 + $0x90] sm:$0xf]
                %222 = vst [vmem:[%s180 + $0x50] sm:$0xf] %v221
                %v223 = vld [vmem:[%s179 + $0x94] sm:$0xf]
                %224 = vst [vmem:[%s180 + $0x54] sm:$0xf] %v223
                %v225 = vld [vmem:[%s179 + $0x98] sm:$0xf]
                %226 = vst [vmem:[%s180 + $0x58] sm:$0xf] %v225
                %v227 = vld [vmem:[%s179 + $0x9c] sm:$0xf]
                %228 = vst [vmem:[%s180 + $0x5c] sm:$0xf] %v227
              $region41: #{rgcn_forward.2} parent=35 // loop_footer
                %s178 = sadd.s32 1, %s174
              $region42: #{rgcn_forward.2} parent=35 // loop_footer_branch
                %173 = sbr.rel target = $region38
              $region43: #{rgcn_forward.2} parent=35 // loop_exit
                _
            $region36: #{rgcn_forward.2} parent=27 // pred_fallthru
              _
          $region28: #{rgcn_forward.2} parent=23 // pred_fallthru
            _
          %296 = vnop
        $region24: #{rgcn_forward.2} parent=19 // pred_fallthru
          _
        // Predicated region
        $region62: #{rgcn_forward.2} parent=19 // pred_check
          %p297 = pneg %p95
        $region63: #{rgcn_forward.2} parent=19 // pred_check_branch
          %299 = sbr.rel (%p297) target = $region65
        $region64: #{rgcn_forward.2} parent=19 // pred_region
          %s300 = smul.u32 8, %s16
          %p301 = scmp.lt.s32.totalorder %s300, 15
          %s302 = scalar_select %p301, %s300, 15
          %s303 = smul.addr %s302, 8
          %s304 = scalar_lea.vmem %s2, %s303
          %s305 = smul.u32 8, %s16
        $region65: #{rgcn_forward.2} parent=19 // pred_fallthru
          _
      $region20: #{rgcn_forward.2} parent=5 // pred_fallthru
        _
      %p306 = scmp.le.s32.totalorder 1, %s9
      %p307 = scmp.lt.s32.totalorder %s9, 3
      %p308 = pnand %p306, %p307
      %p309 = pneg %p308
      // Predicated region
      $region66: #{rgcn_forward.2} parent=5 // pred_check
        _
      $region67: #{rgcn_forward.2} parent=5 // pred_check_branch
        %311 = sbr.rel (%p308) target = $region69
      $region68: #{rgcn_forward.2} parent=5 // pred_region
        %s312 = ssub.s32 %s9, 1
        %s313 = sand.u32 %s36, 1
        %s314 = sand.u32 %s36, 1
        %s315 = smul.addr %s314, 96
        %s316 = scalar_lea.vmem [#allocation3], %s315
        // Predicated region
        $region70: #{rgcn_forward.2} parent=68 // pred_check
          %p317 = pneg %p49
        $region71: #{rgcn_forward.2} parent=68 // pred_check_branch
          %319 = sbr.rel (%p317) target = $region73
        $region72: #{rgcn_forward.2} parent=68 // pred_region
          _
        $region73: #{rgcn_forward.2} parent=68 // pred_fallthru
          _
        %s320 = sand.u32 %s36, 1
        %s321 = sand.u32 %s36, 1
        %s322 = smul.addr %s321, 96
        %s323 = scalar_lea.vmem [#allocation3], %s322
        %p324 = pneg %p49
        %p325 = pneg %p46
        %s326 = smul.u32 16, %s19
        %p327 = scmp.lt.s32.totalorder %s326, 15
        %s328 = scalar_select %p327, %s326, 15
        %s329 = smul.addr %s328, 4
        %s330 = scalar_lea.vmem %s1, %s329
        %p331 = pneg %p75
        %p332 = pneg %p72
        %s333 = smul.u32 8, %s18
        %p334 = scmp.lt.s32.totalorder %s333, 15
        %s335 = scalar_select %p334, %s333, 15
        %s336 = smul.addr %s335, 8
        %s337 = scalar_lea.vmem %s2, %s336
        %p338 = pneg %p101
        %p339 = pneg %p98
        %p340 = pneg %p127
        %p341 = pneg %p124
        %s342 = smul.u32 8, %s18
        %p343 = scmp.lt.s32.totalorder %s342, 15
        %s344 = scalar_select %p343, %s342, 15
        %s345 = smul.addr %s344, 4
        %s346 = scalar_lea.vmem %s3, %s345
        %s347 = smul.u32 8, %s18
        %s348 = smul.u32 16, %s19
        %p349 = scmp.lt.s32.totalorder %s348, 15
        %s350 = scalar_select %p349, %s348, 15
        %s351 = smul.addr %s350, 4
        %s352 = scalar_lea.vmem %s1, %s351
        %s353 = smul.u32 16, %s19
        %s354 = smul.u32 8, %s18
        %p355 = scmp.lt.s32.totalorder %s354, 15
        %s356 = scalar_select %p355, %s354, 15
        %s357 = smul.addr %s356, 8
        %s358 = scalar_lea.vmem %s2, %s357
        %s359 = smul.u32 8, %s18
        %s360 = smul.u32 8, %s18
        %p361 = scmp.lt.s32.totalorder %s360, 15
        %s362 = scalar_select %p361, %s360, 15
        %s363 = smul.addr %s362, 4
        %s364 = scalar_lea.vmem %s3, %s363
        %s365 = smul.u32 8, %s18
        %p367 = scmp.eq.s32.totalorder %s19, 0
        // Predicated region
        $region74: #{rgcn_forward.2} parent=68 // pred_check
          %p368 = pneg %p367
        $region75: #{rgcn_forward.2} parent=68 // pred_check_branch
          %370 = sbr.rel (%p368) target = $region77
        $region76: #{rgcn_forward.2} parent=68 // pred_region
          %371 = vst [vmem:[#allocation2] sm:$0xff] 0.0
          %372 = vst [vmem:[#allocation2 + $0x8] sm:$0xff] 0.0
          %373 = vst [vmem:[#allocation2 + $0x10] sm:$0xff] 0.0
          %374 = vst [vmem:[#allocation2 + $0x18] sm:$0xff] 0.0
          %375 = vst [vmem:[#allocation2 + $0x20] sm:$0xff] 0.0
          %376 = vst [vmem:[#allocation2 + $0x28] sm:$0xff] 0.0
          %377 = vst [vmem:[#allocation2 + $0x30] sm:$0xff] 0.0
          %378 = vst [vmem:[#allocation2 + $0x38] sm:$0xff] 0.0
        $region77: #{rgcn_forward.2} parent=68 // pred_fallthru
          _
        %v379 = vld [vmem:[#allocation2] sm:$0xff]
        %v380 = vld [vmem:[#allocation2 + $0x8] sm:$0xff]
        %v381 = vld [vmem:[#allocation2 + $0x10] sm:$0xff]
        %v382 = vld [vmem:[#allocation2 + $0x18] sm:$0xff]
        %v383 = vld [vmem:[#allocation2 + $0x20] sm:$0xff]
        %v384 = vld [vmem:[#allocation2 + $0x28] sm:$0xff]
        %v385 = vld [vmem:[#allocation2 + $0x30] sm:$0xff]
        %v386 = vld [vmem:[#allocation2 + $0x38] sm:$0xff]
        %v387 = vld [vmem:[%s316] sm:$0xf]
        %v388 = vld [vmem:[%s316 + $0x4] sm:$0xf]
        %v389 = vld [vmem:[%s316 + $0x8] sm:$0xf]
        %v390 = vld [vmem:[%s316 + $0xc] sm:$0xf]
        %v391 = vld [vmem:[%s316 + $0x10] sm:$0xf]
        %v392 = vld [vmem:[%s316 + $0x14] sm:$0xf]
        %v393 = vld [vmem:[%s316 + $0x18] sm:$0xf]
        %v394 = vld [vmem:[%s316 + $0x1c] sm:$0xf]
        %v395 = vld [vmem:[%s352] sm:$0xf]
        %v396 = vld [vmem:[%s352 + $0x4] sm:$0xf]
        %v397 = vld [vmem:[%s352 + $0x8] sm:$0xf]
        %v398 = vld [vmem:[%s352 + $0xc] sm:$0xf]
        %v399 = vld [vmem:[%s352 + $0x10] sm:$0xf]
        %v400 = vld [vmem:[%s352 + $0x14] sm:$0xf]
        %v401 = vld [vmem:[%s352 + $0x18] sm:$0xf]
        %v402 = vld [vmem:[%s352 + $0x1c] sm:$0xf]
        %v403 = vld [vmem:[%s352 + $0x20] sm:$0xf]
        %v404 = vld [vmem:[%s352 + $0x24] sm:$0xf]
        %v405 = vld [vmem:[%s352 + $0x28] sm:$0xf]
        %v406 = vld [vmem:[%s352 + $0x2c] sm:$0xf]
        %v407 = vld [vmem:[%s352 + $0x30] sm:$0xf]
        %v408 = vld [vmem:[%s352 + $0x34] sm:$0xf]
        %v409 = vld [vmem:[%s352 + $0x38] sm:$0xf]
        %v410 = vld [vmem:[%s352 + $0x3c] sm:$0xf]
        %v419 = vunpack.c.l.b16 %v387
        %v420 = vunpack.c.l.b16 %v388
        %v421 = vunpack.c.l.b16 %v389
        %v422 = vunpack.c.l.b16 %v390
        %v423 = vunpack.c.l.b16 %v391
        %v424 = vunpack.c.l.b16 %v392
        %v425 = vunpack.c.l.b16 %v393
        %v426 = vunpack.c.l.b16 %v394
        %v427 = vpack.c.b16 %v420, %v419
        %v428 = vpack.c.b16 %v422, %v421
        %v429 = vpack.c.b16 %v424, %v423
        %v430 = vpack.c.b16 %v426, %v425
        %v451 = vunpack.c.l.b16 %v395
        %v452 = vunpack.c.l.b16 %v396
        %v453 = vunpack.c.l.b16 %v397
        %v454 = vunpack.c.l.b16 %v398
        %v455 = vunpack.c.l.b16 %v399
        %v456 = vunpack.c.l.b16 %v400
        %v457 = vunpack.c.l.b16 %v401
        %v458 = vunpack.c.l.b16 %v402
        %v459 = vunpack.c.l.b16 %v403
        %v460 = vunpack.c.l.b16 %v404
        %v461 = vunpack.c.l.b16 %v405
        %v462 = vunpack.c.l.b16 %v406
        %v463 = vunpack.c.l.b16 %v407
        %v464 = vunpack.c.l.b16 %v408
        %v465 = vunpack.c.l.b16 %v409
        %v466 = vunpack.c.l.b16 %v410
        %v467 = vpack.c.b16 %v452, %v451
        %v468 = vpack.c.b16 %v454, %v453
        %v469 = vpack.c.b16 %v456, %v455
        %v470 = vpack.c.b16 %v458, %v457
        %v471 = vpack.c.b16 %v460, %v459
        %v472 = vpack.c.b16 %v462, %v461
        %v473 = vpack.c.b16 %v464, %v463
        %v474 = vpack.c.b16 %v466, %v465
        %483 = vmatprep.subr.bf16.mxu0 0
        %484 = vmatpush1.bf16.msra.mxu0 %v467
        %485 = vmatprep.subr.bf16.mxu0 0
        %486 = vmatpush1.bf16.msra.mxu0 %v468
        %487 = vmatprep.subr.bf16.mxu0 0
        %488 = vmatpush1.bf16.msra.mxu0 %v469
        %489 = vmatprep.subr.bf16.mxu0 0
        %490 = vmatpush1.bf16.msra.mxu0 %v470
        %491 = vmatprep.subr.bf16.mxu0 0
        %492 = vmatpush1.bf16.msra.mxu0 %v471
        %493 = vmatprep.subr.bf16.mxu0 0
        %494 = vmatpush1.bf16.msra.mxu0 %v472
        %495 = vmatprep.subr.bf16.mxu0 0
        %496 = vmatpush1.bf16.msra.mxu0 %v473
        %497 = vmatprep.subr.bf16.mxu0 0
        %498 = vmatpush1.bf16.msra.mxu0 %v474
        %499 = vmatprep.subr.bf16.mxu0 0
        %500 = vmatpush1.bf16.msra.mxu0 0
        %501 = vmatprep.subr.bf16.mxu0 0
        %502 = vmatpush1.bf16.msra.mxu0 0
        %503 = vmatprep.subr.bf16.mxu0 0
        %504 = vmatpush1.bf16.msra.mxu0 0
        %505 = vmatprep.subr.bf16.mxu0 0
        %506 = vmatpush1.bf16.msra.mxu0 0
        %507 = vmatprep.subr.bf16.mxu0 0
        %508 = vmatpush1.bf16.msra.mxu0 0
        %509 = vmatprep.subr.bf16.mxu0 0
        %510 = vmatpush1.bf16.msra.mxu0 0
        %511 = vmatprep.subr.bf16.mxu0 0
        %512 = vmatpush1.bf16.msra.mxu0 0
        %513 = vmatprep.subr.bf16.mxu0 0
        %514 = vmatpush1.bf16.msra.mxu0 0
        %515 = vmatprep.mubr.bf16.mxu0 0
        %516 = vmatmul.mubr.bf16.gmra.mrb[0].mxu0 %v427
        %v517 = vpop.f32.mrb[0].mxu0
        %v518 = vadd.f32 0.0, %v517
        %v519 = vpop.f32.mrb[0].mxu0
        %v520 = vpop.f32.mrb[0].mxu0
        %v521 = vadd.f32 0.0, %v520
        %v522 = vpop.f32.mrb[0].mxu0
        %523 = vmatprep.mubr.bf16.mxu0 0
        %524 = vmatmul.mubr.bf16.gmra.mrb[0].mxu0 %v428
        %v525 = vpop.f32.mrb[0].mxu0
        %v526 = vadd.f32 0.0, %v525
        %v527 = vpop.f32.mrb[0].mxu0
        %v528 = vpop.f32.mrb[0].mxu0
        %v529 = vadd.f32 0.0, %v528
        %v530 = vpop.f32.mrb[0].mxu0
        %531 = vmatprep.mubr.bf16.mxu0 0
        %532 = vmatmul.mubr.bf16.gmra.mrb[0].mxu0 %v429
        %v533 = vpop.f32.mrb[0].mxu0
        %v534 = vadd.f32 0.0, %v533
        %v535 = vpop.f32.mrb[0].mxu0
        %v536 = vpop.f32.mrb[0].mxu0
        %v537 = vadd.f32 0.0, %v536
        %v538 = vpop.f32.mrb[0].mxu0
        %539 = vmatprep.mubr.bf16.mxu0 0
        %540 = vmatmul.mubr.bf16.gmra.mrb[0].mxu0 %v430
        %v541 = vpop.f32.mrb[0].mxu0
        %v542 = vadd.f32 0.0, %v541
        %v543 = vpop.f32.mrb[0].mxu0
        %v544 = vpop.f32.mrb[0].mxu0
        %v545 = vadd.f32 0.0, %v544
        %v546 = vpop.f32.mrb[0].mxu0
        %547 = vdwg.mxu0
        %v548 = vadd.f32 %v379, %v518
        %v549 = vadd.f32 %v380, %v521
        %v550 = vadd.f32 %v381, %v526
        %v551 = vadd.f32 %v382, %v529
        %v552 = vadd.f32 %v383, %v534
        %v553 = vadd.f32 %v384, %v537
        %v554 = vadd.f32 %v385, %v542
        %v555 = vadd.f32 %v386, %v545
        %s556 = scalar_lea.vmem %s316, 32 [#allocation3]
        %v557 = vld [vmem:[%s556] sm:$0xf]
        %v558 = vld [vmem:[%s556 + $0x4] sm:$0xf]
        %v559 = vld [vmem:[%s556 + $0x8] sm:$0xf]
        %v560 = vld [vmem:[%s556 + $0xc] sm:$0xf]
        %v561 = vld [vmem:[%s556 + $0x10] sm:$0xf]
        %v562 = vld [vmem:[%s556 + $0x14] sm:$0xf]
        %v563 = vld [vmem:[%s556 + $0x18] sm:$0xf]
        %v564 = vld [vmem:[%s556 + $0x1c] sm:$0xf]
        %s565 = scalar_lea.vmem %s352, 64
        %v566 = vld [vmem:[%s565] sm:$0xf]
        %v567 = vld [vmem:[%s565 + $0x4] sm:$0xf]
        %v568 = vld [vmem:[%s565 + $0x8] sm:$0xf]
        %v569 = vld [vmem:[%s565 + $0xc] sm:$0xf]
        %v570 = vld [vmem:[%s565 + $0x10] sm:$0xf]
        %v571 = vld [vmem:[%s565 + $0x14] sm:$0xf]
        %v572 = vld [vmem:[%s565 + $0x18] sm:$0xf]
        %v573 = vld [vmem:[%s565 + $0x1c] sm:$0xf]
        %v574 = vld [vmem:[%s565 + $0x20] sm:$0xf]
        %v575 = vld [vmem:[%s565 + $0x24] sm:$0xf]
        %v576 = vld [vmem:[%s565 + $0x28] sm:$0xf]
        %v577 = vld [vmem:[%s565 + $0x2c] sm:$0xf]
        %v578 = vld [vmem:[%s565 + $0x30] sm:$0xf]
        %v579 = vld [vmem:[%s565 + $0x34] sm:$0xf]
        %v580 = vld [vmem:[%s565 + $0x38] sm:$0xf]
        %v581 = vld [vmem:[%s565 + $0x3c] sm:$0xf]
        %v590 = vunpack.c.l.b16 %v557
        %v591 = vunpack.c.l.b16 %v558
        %v592 = vunpack.c.l.b16 %v559
        %v593 = vunpack.c.l.b16 %v560
        %v594 = vunpack.c.l.b16 %v561
        %v595 = vunpack.c.l.b16 %v562
        %v596 = vunpack.c.l.b16 %v563
        %v597 = vunpack.c.l.b16 %v564
        %v598 = vpack.c.b16 %v591, %v590
        %v599 = vpack.c.b16 %v593, %v592
        %v600 = vpack.c.b16 %v595, %v594
        %v601 = vpack.c.b16 %v597, %v596
        %v622 = vunpack.c.l.b16 %v566
        %v623 = vunpack.c.l.b16 %v567
        %v624 = vunpack.c.l.b16 %v568
        %v625 = vunpack.c.l.b16 %v569
        %v626 = vunpack.c.l.b16 %v570
        %v627 = vunpack.c.l.b16 %v571
        %v628 = vunpack.c.l.b16 %v572
        %v629 = vunpack.c.l.b16 %v573
        %v630 = vunpack.c.l.b16 %v574
        %v631 = vunpack.c.l.b16 %v575
        %v632 = vunpack.c.l.b16 %v576
        %v633 = vunpack.c.l.b16 %v577
        %v634 = vunpack.c.l.b16 %v578
        %v635 = vunpack.c.l.b16 %v579
        %v636 = vunpack.c.l.b16 %v580
        %v637 = vunpack.c.l.b16 %v581
        %v638 = vpack.c.b16 %v623, %v622
        %v639 = vpack.c.b16 %v625, %v624
        %v640 = vpack.c.b16 %v627, %v626
        %v641 = vpack.c.b16 %v629, %v628
        %v642 = vpack.c.b16 %v631, %v630
        %v643 = vpack.c.b16 %v633, %v632
        %v644 = vpack.c.b16 %v635, %v634
        %v645 = vpack.c.b16 %v637, %v636
        %654 = vmatprep.subr.bf16.mxu0 0
        %655 = vmatpush1.bf16.msra.mxu0 %v638
        %656 = vmatprep.subr.bf16.mxu0 0
        %657 = vmatpush1.bf16.msra.mxu0 %v639
        %658 = vmatprep.subr.bf16.mxu0 0
        %659 = vmatpush1.bf16.msra.mxu0 %v640
        %660 = vmatprep.subr.bf16.mxu0 0
        %661 = vmatpush1.bf16.msra.mxu0 %v641
        %662 = vmatprep.subr.bf16.mxu0 0
        %663 = vmatpush1.bf16.msra.mxu0 %v642
        %664 = vmatprep.subr.bf16.mxu0 0
        %665 = vmatpush1.bf16.msra.mxu0 %v643
        %666 = vmatprep.subr.bf16.mxu0 0
        %667 = vmatpush1.bf16.msra.mxu0 %v644
        %668 = vmatprep.subr.bf16.mxu0 0
        %669 = vmatpush1.bf16.msra.mxu0 %v645
        %670 = vmatprep.subr.bf16.mxu0 0
        %671 = vmatpush1.bf16.msra.mxu0 0
        %672 = vmatprep.subr.bf16.mxu0 0
        %673 = vmatpush1.bf16.msra.mxu0 0
        %674 = vmatprep.subr.bf16.mxu0 0
        %675 = vmatpush1.bf16.msra.mxu0 0
        %676 = vmatprep.subr.bf16.mxu0 0
        %677 = vmatpush1.bf16.msra.mxu0 0
        %678 = vmatprep.subr.bf16.mxu0 0
        %679 = vmatpush1.bf16.msra.mxu0 0
        %680 = vmatprep.subr.bf16.mxu0 0
        %681 = vmatpush1.bf16.msra.mxu0 0
        %682 = vmatprep.subr.bf16.mxu0 0
        %683 = vmatpush1.bf16.msra.mxu0 0
        %684 = vmatprep.subr.bf16.mxu0 0
        %685 = vmatpush1.bf16.msra.mxu0 0
        %686 = vmatprep.mubr.bf16.mxu0 0
        %687 = vmatmul.mubr.bf16.gmra.mrb[0].mxu0 %v598
        %v688 = vpop.f32.mrb[0].mxu0
        %v689 = vadd.f32 0.0, %v688
        %v690 = vpop.f32.mrb[0].mxu0
        %v691 = vpop.f32.mrb[0].mxu0
        %v692 = vadd.f32 0.0, %v691
        %v693 = vpop.f32.mrb[0].mxu0
        %694 = vmatprep.mubr.bf16.mxu0 0
        %695 = vmatmul.mubr.bf16.gmra.mrb[0].mxu0 %v599
        %v696 = vpop.f32.mrb[0].mxu0
        %v697 = vadd.f32 0.0, %v696
        %v698 = vpop.f32.mrb[0].mxu0
        %v699 = vpop.f32.mrb[0].mxu0
        %v700 = vadd.f32 0.0, %v699
        %v701 = vpop.f32.mrb[0].mxu0
        %702 = vmatprep.mubr.bf16.mxu0 0
        %703 = vmatmul.mubr.bf16.gmra.mrb[0].mxu0 %v600
        %v704 = vpop.f32.mrb[0].mxu0
        %v705 = vadd.f32 0.0, %v704
        %v706 = vpop.f32.mrb[0].mxu0
        %v707 = vpop.f32.mrb[0].mxu0
        %v708 = vadd.f32 0.0, %v707
        %v709 = vpop.f32.mrb[0].mxu0
        %710 = vmatprep.mubr.bf16.mxu0 0
        %711 = vmatmul.mubr.bf16.gmra.mrb[0].mxu0 %v601
        %v712 = vpop.f32.mrb[0].mxu0
        %v713 = vadd.f32 0.0, %v712
        %v714 = vpop.f32.mrb[0].mxu0
        %v715 = vpop.f32.mrb[0].mxu0
        %v716 = vadd.f32 0.0, %v715
        %v717 = vpop.f32.mrb[0].mxu0
        %718 = vdwg.mxu0
        %v719 = vadd.f32 %v548, %v689
        %v720 = vadd.f32 %v549, %v692
        %v721 = vadd.f32 %v550, %v697
        %v722 = vadd.f32 %v551, %v700
        %v723 = vadd.f32 %v552, %v705
        %v724 = vadd.f32 %v553, %v708
        %v725 = vadd.f32 %v554, %v713
        %v726 = vadd.f32 %v555, %v716
        %s727 = scalar_lea.vmem %s316, 64 [#allocation3]
        %v728 = vld [vmem:[%s727] sm:$0xf]
        %v729 = vld [vmem:[%s727 + $0x4] sm:$0xf]
        %v730 = vld [vmem:[%s727 + $0x8] sm:$0xf]
        %v731 = vld [vmem:[%s727 + $0xc] sm:$0xf]
        %v732 = vld [vmem:[%s727 + $0x10] sm:$0xf]
        %v733 = vld [vmem:[%s727 + $0x14] sm:$0xf]
        %v734 = vld [vmem:[%s727 + $0x18] sm:$0xf]
        %v735 = vld [vmem:[%s727 + $0x1c] sm:$0xf]
        %s736 = scalar_lea.vmem %s352, 128
        %v737 = vld [vmem:[%s736] sm:$0xf]
        %v738 = vld [vmem:[%s736 + $0x4] sm:$0xf]
        %v739 = vld [vmem:[%s736 + $0x8] sm:$0xf]
        %v740 = vld [vmem:[%s736 + $0xc] sm:$0xf]
        %v741 = vld [vmem:[%s736 + $0x10] sm:$0xf]
        %v742 = vld [vmem:[%s736 + $0x14] sm:$0xf]
        %v743 = vld [vmem:[%s736 + $0x18] sm:$0xf]
        %v744 = vld [vmem:[%s736 + $0x1c] sm:$0xf]
        %v745 = vld [vmem:[%s736 + $0x20] sm:$0xf]
        %v746 = vld [vmem:[%s736 + $0x24] sm:$0xf]
        %v747 = vld [vmem:[%s736 + $0x28] sm:$0xf]
        %v748 = vld [vmem:[%s736 + $0x2c] sm:$0xf]
        %v749 = vld [vmem:[%s736 + $0x30] sm:$0xf]
        %v750 = vld [vmem:[%s736 + $0x34] sm:$0xf]
        %v751 = vld [vmem:[%s736 + $0x38] sm:$0xf]
        %v752 = vld [vmem:[%s736 + $0x3c] sm:$0xf]
        %v761 = vunpack.c.l.b16 %v728
        %v762 = vunpack.c.l.b16 %v729
        %v763 = vunpack.c.l.b16 %v730
        %v764 = vunpack.c.l.b16 %v731
        %v765 = vunpack.c.l.b16 %v732
        %v766 = vunpack.c.l.b16 %v733
        %v767 = vunpack.c.l.b16 %v734
        %v768 = vunpack.c.l.b16 %v735
        %v769 = vpack.c.b16 %v762, %v761
        %v770 = vpack.c.b16 %v764, %v763
        %v771 = vpack.c.b16 %v766, %v765
        %v772 = vpack.c.b16 %v768, %v767
        %v793 = vunpack.c.l.b16 %v737
        %v794 = vunpack.c.l.b16 %v738
        %v795 = vunpack.c.l.b16 %v739
        %v796 = vunpack.c.l.b16 %v740
        %v797 = vunpack.c.l.b16 %v741
        %v798 = vunpack.c.l.b16 %v742
        %v799 = vunpack.c.l.b16 %v743
        %v800 = vunpack.c.l.b16 %v744
        %v801 = vunpack.c.l.b16 %v745
        %v802 = vunpack.c.l.b16 %v746
        %v803 = vunpack.c.l.b16 %v747
        %v804 = vunpack.c.l.b16 %v748
        %v805 = vunpack.c.l.b16 %v749
        %v806 = vunpack.c.l.b16 %v750
        %v807 = vunpack.c.l.b16 %v751
        %v808 = vunpack.c.l.b16 %v752
        %v809 = vpack.c.b16 %v794, %v793
        %v810 = vpack.c.b16 %v796, %v795
        %v811 = vpack.c.b16 %v798, %v797
        %v812 = vpack.c.b16 %v800, %v799
        %v813 = vpack.c.b16 %v802, %v801
        %v814 = vpack.c.b16 %v804, %v803
        %v815 = vpack.c.b16 %v806, %v805
        %v816 = vpack.c.b16 %v808, %v807
        %825 = vmatprep.subr.bf16.mxu0 0
        %826 = vmatpush1.bf16.msra.mxu0 %v809
        %827 = vmatprep.subr.bf16.mxu0 0
        %828 = vmatpush1.bf16.msra.mxu0 %v810
        %829 = vmatprep.subr.bf16.mxu0 0
        %830 = vmatpush1.bf16.msra.mxu0 %v811
        %831 = vmatprep.subr.bf16.mxu0 0
        %832 = vmatpush1.bf16.msra.mxu0 %v812
        %833 = vmatprep.subr.bf16.mxu0 0
        %834 = vmatpush1.bf16.msra.mxu0 %v813
        %835 = vmatprep.subr.bf16.mxu0 0
        %836 = vmatpush1.bf16.msra.mxu0 %v814
        %837 = vmatprep.subr.bf16.mxu0 0
        %838 = vmatpush1.bf16.msra.mxu0 %v815
        %839 = vmatprep.subr.bf16.mxu0 0
        %840 = vmatpush1.bf16.msra.mxu0 %v816
        %841 = vmatprep.subr.bf16.mxu0 0
        %842 = vmatpush1.bf16.msra.mxu0 0
        %843 = vmatprep.subr.bf16.mxu0 0
        %844 = vmatpush1.bf16.msra.mxu0 0
        %845 = vmatprep.subr.bf16.mxu0 0
        %846 = vmatpush1.bf16.msra.mxu0 0
        %847 = vmatprep.subr.bf16.mxu0 0
        %848 = vmatpush1.bf16.msra.mxu0 0
        %849 = vmatprep.subr.bf16.mxu0 0
        %850 = vmatpush1.bf16.msra.mxu0 0
        %851 = vmatprep.subr.bf16.mxu0 0
        %852 = vmatpush1.bf16.msra.mxu0 0
        %853 = vmatprep.subr.bf16.mxu0 0
        %854 = vmatpush1.bf16.msra.mxu0 0
        %855 = vmatprep.subr.bf16.mxu0 0
        %856 = vmatpush1.bf16.msra.mxu0 0
        %857 = vmatprep.mubr.bf16.mxu0 0
        %858 = vmatmul.mubr.bf16.gmra.mrb[0].mxu0 %v769
        %v859 = vpop.f32.mrb[0].mxu0
        %v860 = vadd.f32 0.0, %v859
        %v861 = vpop.f32.mrb[0].mxu0
        %v862 = vpop.f32.mrb[0].mxu0
        %v863 = vadd.f32 0.0, %v862
        %v864 = vpop.f32.mrb[0].mxu0
        %865 = vmatprep.mubr.bf16.mxu0 0
        %866 = vmatmul.mubr.bf16.gmra.mrb[0].mxu0 %v770
        %v867 = vpop.f32.mrb[0].mxu0
        %v868 = vadd.f32 0.0, %v867
        %v869 = vpop.f32.mrb[0].mxu0
        %v870 = vpop.f32.mrb[0].mxu0
        %v871 = vadd.f32 0.0, %v870
        %v872 = vpop.f32.mrb[0].mxu0
        %873 = vmatprep.mubr.bf16.mxu0 0
        %874 = vmatmul.mubr.bf16.gmra.mrb[0].mxu0 %v771
        %v875 = vpop.f32.mrb[0].mxu0
        %v876 = vadd.f32 0.0, %v875
        %v877 = vpop.f32.mrb[0].mxu0
        %v878 = vpop.f32.mrb[0].mxu0
        %v879 = vadd.f32 0.0, %v878
        %v880 = vpop.f32.mrb[0].mxu0
        %881 = vmatprep.mubr.bf16.mxu0 0
        %882 = vmatmul.mubr.bf16.gmra.mrb[0].mxu0 %v772
        %v883 = vpop.f32.mrb[0].mxu0
        %v884 = vadd.f32 0.0, %v883
        %v885 = vpop.f32.mrb[0].mxu0
        %v886 = vpop.f32.mrb[0].mxu0
        %v887 = vadd.f32 0.0, %v886
        %v888 = vpop.f32.mrb[0].mxu0
        %889 = vdwg.mxu0
        %v890 = vadd.f32 %v719, %v860
        %v891 = vadd.f32 %v720, %v863
        %v892 = vadd.f32 %v721, %v868
        %v893 = vadd.f32 %v722, %v871
        %v894 = vadd.f32 %v723, %v876
        %v895 = vadd.f32 %v724, %v879
        %v896 = vadd.f32 %v725, %v884
        %v897 = vadd.f32 %v726, %v887
        %898 = vst [vmem:[#allocation2] sm:$0xff] %v890
        %899 = vst [vmem:[#allocation2 + $0x8] sm:$0xff] %v891
        %900 = vst [vmem:[#allocation2 + $0x10] sm:$0xff] %v892
        %901 = vst [vmem:[#allocation2 + $0x18] sm:$0xff] %v893
        %902 = vst [vmem:[#allocation2 + $0x20] sm:$0xff] %v894
        %903 = vst [vmem:[#allocation2 + $0x28] sm:$0xff] %v895
        %904 = vst [vmem:[#allocation2 + $0x30] sm:$0xff] %v896
        %905 = vst [vmem:[#allocation2 + $0x38] sm:$0xff] %v897
        // Predicated region
        $region78: #{rgcn_forward.2} parent=68 // pred_check
          %p906 = pneg %p367
        $region79: #{rgcn_forward.2} parent=68 // pred_check_branch
          %908 = sbr.rel (%p906) target = $region81
        $region80: #{rgcn_forward.2} parent=68 // pred_region
          %v909 = vld [vmem:[#allocation2] sm:$0xff]
          %v910 = vld [vmem:[#allocation2 + $0x8] sm:$0xff]
          %v911 = vld [vmem:[#allocation2 + $0x10] sm:$0xff]
          %v912 = vld [vmem:[#allocation2 + $0x18] sm:$0xff]
          %v913 = vld [vmem:[#allocation2 + $0x20] sm:$0xff]
          %v914 = vld [vmem:[#allocation2 + $0x28] sm:$0xff]
          %v915 = vld [vmem:[#allocation2 + $0x30] sm:$0xff]
          %v916 = vld [vmem:[#allocation2 + $0x38] sm:$0xff]
          %v917 = vld [vmem:[%s358] sm:$0xff]
          %v918 = vld [vmem:[%s358 + $0x8] sm:$0xff]
          %v919 = vld [vmem:[%s358 + $0x10] sm:$0xff]
          %v920 = vld [vmem:[%s358 + $0x18] sm:$0xff]
          %v921 = vld [vmem:[%s358 + $0x20] sm:$0xff]
          %v922 = vld [vmem:[%s358 + $0x28] sm:$0xff]
          %v923 = vld [vmem:[%s358 + $0x30] sm:$0xff]
          %v924 = vld [vmem:[%s358 + $0x38] sm:$0xff]
          %v925 = vadd.f32 %v909, %v917
          %v926 = vadd.f32 %v910, %v918
          %v927 = vadd.f32 %v911, %v919
          %v928 = vadd.f32 %v912, %v920
          %v929 = vadd.f32 %v913, %v921
          %v930 = vadd.f32 %v914, %v922
          %v931 = vadd.f32 %v915, %v923
          %v932 = vadd.f32 %v916, %v924
          %v933 = vmax.f32 %v925, 0.0
          %v934 = vmax.f32 %v926, 0.0
          %v935 = vmax.f32 %v927, 0.0
          %v936 = vmax.f32 %v928, 0.0
          %v937 = vmax.f32 %v929, 0.0
          %v938 = vmax.f32 %v930, 0.0
          %v939 = vmax.f32 %v931, 0.0
          %v940 = vmax.f32 %v932, 0.0
          %v941 = vpack.c.bf16 %v934, %v933
          %v942 = vpack.c.bf16 %v936, %v935
          %v943 = vpack.c.bf16 %v938, %v937
          %v944 = vpack.c.bf16 %v940, %v939
          %v949 = vunpack.c.l.b16 %v941
          %v950 = vunpack.c.h.b16 %v941
          %v951 = vunpack.c.l.b16 %v942
          %v952 = vunpack.c.h.b16 %v942
          %v953 = vunpack.c.l.b16 %v943
          %v954 = vunpack.c.h.b16 %v943
          %v955 = vunpack.c.l.b16 %v944
          %v956 = vunpack.c.h.b16 %v944
          %v957 = vpack.c.b16 %v949, %v949
          %v958 = vpack.c.b16 %v950, %v950
          %v959 = vpack.c.b16 %v951, %v951
          %v960 = vpack.c.b16 %v952, %v952
          %v961 = vpack.c.b16 %v953, %v953
          %v962 = vpack.c.b16 %v954, %v954
          %v963 = vpack.c.b16 %v955, %v955
          %v964 = vpack.c.b16 %v956, %v956
          %973 = vst [vmem:[%s364] sm:$0xf] %v957
          %974 = vst [vmem:[%s364 + $0x4] sm:$0xf] %v958
          %975 = vst [vmem:[%s364 + $0x8] sm:$0xf] %v959
          %976 = vst [vmem:[%s364 + $0xc] sm:$0xf] %v960
          %977 = vst [vmem:[%s364 + $0x10] sm:$0xf] %v961
          %978 = vst [vmem:[%s364 + $0x14] sm:$0xf] %v962
          %979 = vst [vmem:[%s364 + $0x18] sm:$0xf] %v963
          %980 = vst [vmem:[%s364 + $0x1c] sm:$0xf] %v964
        $region81: #{rgcn_forward.2} parent=68 // pred_fallthru
          _
        %s981 = smul.u32 8, %s18
        %p982 = scmp.lt.s32.totalorder %s981, 15
        %s983 = scalar_select %p982, %s981, 15
        %s984 = smul.addr %s983, 4
        %s985 = scalar_lea.vmem %s3, %s984
        // Predicated region
        $region82: #{rgcn_forward.2} parent=68 // pred_check
          %p986 = pneg %p124
        $region83: #{rgcn_forward.2} parent=68 // pred_check_branch
          %988 = sbr.rel (%p986) target = $region85
        $region84: #{rgcn_forward.2} parent=68 // pred_region
          %s989 = smul.u32 8, %s18
        $region85: #{rgcn_forward.2} parent=68 // pred_fallthru
          _
      $region69: #{rgcn_forward.2} parent=5 // pred_fallthru
        _
      %p990 = scmp.le.s32.totalorder 2, %s9
      // Predicated region
      $region86: #{rgcn_forward.2} parent=5 // pred_check
        %p991 = pneg %p990
      $region87: #{rgcn_forward.2} parent=5 // pred_check_branch
        %993 = sbr.rel (%p991) target = $region89
      $region88: #{rgcn_forward.2} parent=5 // pred_region
        %s994 = ssub.s32 %s9, 2
        // Predicated region
        $region90: #{rgcn_forward.2} parent=88 // pred_check
          %p995 = pneg %p130
        $region91: #{rgcn_forward.2} parent=88 // pred_check_branch
          %997 = sbr.rel (%p995) target = $region93
        $region92: #{rgcn_forward.2} parent=88 // pred_region
          %s998 = smul.u32 8, %s20
          %p999 = scmp.lt.s32.totalorder %s998, 15
          %s1000 = scalar_select %p999, %s998, 15
          %s1001 = smul.addr %s1000, 4
          %s1002 = scalar_lea.vmem %s3, %s1001
        $region93: #{rgcn_forward.2} parent=88 // pred_fallthru
          _
      $region89: #{rgcn_forward.2} parent=5 // pred_fallthru
        _
    $region6: #{rgcn_forward.2} parent=1 // loop_footer
      %s13 = sadd.s32 1, %s9
    $region7: #{rgcn_forward.2} parent=1 // loop_footer_branch
      %8 = sbr.rel target = $region3
    $region8: #{rgcn_forward.2} parent=1 // loop_exit
      _

// kernel: rgcn_forward.3
$region0: #{rgcn_forward.3}
  #allocation0 [shape = 'u32[]', space=smem, size = 0x4, offset = 0x4, fixed_abs, tag = 'smem constant byte address 0x4 - core index']
  #allocation1 [shape = 'u32[144,128]{1,0:T(1,128)}', space=vmem, size = 0x12000, scoped, tag = 'internal scratch']
  #allocation2 [shape = 'f32[3,64,128]{2,1,0:T(8,128)}', space=vmem, size = 0x18000, scoped, tag = 'scratch operand']
  %s0 = inlined_call_operand.vmem [shape: bf16[3,128,128], index: 0, kind: input, shape index: {}]
  %s1 = inlined_call_operand.vmem [shape: bf16[128,128], index: 1, kind: input, shape index: {}, may-alias: {1,2}]
  %s2 = inlined_call_operand.vmem [shape: bf16[128,128], index: 2, kind: input, shape index: {}, may-alias: {1,2}]
  %s3 = inlined_call_operand.vmem [shape: bf16[512,128], index: 3, kind: input, shape index: {}]
  %s4 = inlined_call_operand.vmem [shape: f32[1,128], index: 4, kind: input, shape index: {}]
  %s5 = inlined_call_operand.vmem [shape: f32[128,128], index: 5, kind: output, shape index: {}]
  %s6 = sld [smem:[#allocation0]]
  $region102: #{rgcn_forward.3} parent=0
    _
  %s8 = ssub.s32 1, %s6
  %s9 = scalar_select 0, %s8, %s6
  $region1: #{rgcn_forward.3} parent=0
    #allocation3 [shape = 'u8[98304]{0}', space=vmem, size = 0x18000, scoped, tag = 'input window, operand 0']
    loop: start=0, step=1, limit=4
    $region2: #{rgcn_forward.3} parent=1 // loop_pre_header
      _
    $region3: #{rgcn_forward.3} parent=1 // loop_header
      %s11 = sphi 0, %s15
      %p12 = scmp.ge.s32.totalorder %s11, 4
      %s18 = sphi 0, %s30
      %s19 = sphi 0, %s26
      %s20 = sphi 0, %s18
      %s21 = sphi 0, %s19
      %s22 = sphi 0, %s20
      %s23 = sphi 0, %s21
      %s35 = sphi 0, %s37
      %s38 = sphi 0, %s35
      %s39 = sphi 0, %s38
      %s55 = sphi 0, %s39
      %s61 = sphi 0, %s63
      %s64 = sphi 0, %s61
      %s65 = sphi 0, %s64
      %s81 = sphi 0, %s65
      %s87 = sphi 0, %s89
      %s90 = sphi 0, %s87
      %s91 = sphi 0, %s90
      %s107 = sphi 0, %s91
      %s111 = sphi 0, %s111
      %s113 = sphi 0, %s111
      %s114 = sphi 0, %s113
      %s128 = sphi 0, %s114
      %s132 = sphi 0, %s132
      %s134 = sphi 0, %s132
      %s135 = sphi 0, %s134
      %s149 = sphi 0, %s135
      %s155 = sphi 0, %s157
      %s158 = sphi 0, %s155
      %s159 = sphi 0, %s158
      %s175 = sphi 0, %s159
    $region4: #{rgcn_forward.3} parent=1 // loop_header_branch
      %14 = sbr.rel (%p12) target = $region8
    $region5: #{rgcn_forward.3} parent=1 // loop_body
      %s16 = ssub.s32 %s11, 1
      %s17 = ssub.s32 %s11, 2
      %s24 = sadd.s32 1, %s19
      %p25 = scmp.ge.s32.totalorder %s24, 1
      %s26 = scalar_select %p25, 0, %s24
      %s27 = sadd.s32 1, %s18
      %s28 = scalar_select %p25, %s27, %s18
      %p29 = scmp.ge.s32.totalorder %s28, 2
      %s30 = scalar_select %p29, 0, %s28
      %s31 = ssub.s32 %s18, %s30
      %s32 = ssub.s32 %s19, %s26
      %s33 = sor.u32 %s31, %s32
      %p34 = scmp.eq.s32.totalorder %s33, 0
      %s36 = sadd.s32 %s35, 1
      %s37 = scalar_select %p34, %s35, %s36
      %p40 = pneg %p34
      %p41 = scmp.eq.s32.totalorder %s11, 1
      %p42 = por %p40, %p41
      %p43 = scmp.ne.s32.totalorder %s35, %s38
      %p44 = scmp.eq.s32.totalorder %s11, 0
      %p45 = por %p43, %p44
      %p46 = scmp.ne.s32.totalorder %s35, %s38
      %p47 = scmp.eq.s32.totalorder %s16, 1
      %p48 = por %p46, %p47
      %p49 = scmp.ne.s32.totalorder %s38, %s39
      %p50 = scmp.eq.s32.totalorder %s16, 0
      %p51 = por %p49, %p50
      %p52 = scmp.ne.s32.totalorder %s38, %s39
      %p53 = scmp.eq.s32.totalorder %s17, 1
      %p54 = por %p52, %p53
      %p56 = scmp.ne.s32.totalorder %s39, %s55
      %p57 = scmp.eq.s32.totalorder %s17, 0
      %p58 = por %p56, %p57
      %s59 = ssub.s32 %s19, %s26
      %p60 = scmp.eq.s32.totalorder %s59, 0
      %s62 = sadd.s32 %s61, 1
      %s63 = scalar_select %p60, %s61, %s62
      %p66 = pneg %p60
      %p67 = scmp.eq.s32.totalorder %s11, 1
      %p68 = por %p66, %p67
      %p69 = scmp.ne.s32.totalorder %s61, %s64
      %p70 = scmp.eq.s32.totalorder %s11, 0
      %p71 = por %p69, %p70
      %p72 = scmp.ne.s32.totalorder %s61, %s64
      %p73 = scmp.eq.s32.totalorder %s16, 1
      %p74 = por %p72, %p73
      %p75 = scmp.ne.s32.totalorder %s64, %s65
      %p76 = scmp.eq.s32.totalorder %s16, 0
      %p77 = por %p75, %p76
      %p78 = scmp.ne.s32.totalorder %s64, %s65
      %p79 = scmp.eq.s32.totalorder %s17, 1
      %p80 = por %p78, %p79
      %p82 = scmp.ne.s32.totalorder %s65, %s81
      %p83 = scmp.eq.s32.totalorder %s17, 0
      %p84 = por %p82, %p83
      %s85 = ssub.s32 %s18, %s30
      %p86 = scmp.eq.s32.totalorder %s85, 0
      %s88 = sadd.s32 %s87, 1
      %s89 = scalar_select %p86, %s87, %s88
      %p92 = pneg %p86
      %p93 = scmp.eq.s32.totalorder %s11, 1
      %p94 = por %p92, %p93
      %p95 = scmp.ne.s32.totalorder %s87, %s90
      %p96 = scmp.eq.s32.totalorder %s11, 0
      %p97 = por %p95, %p96
      %p98 = scmp.ne.s32.totalorder %s87, %s90
      %p99 = scmp.eq.s32.totalorder %s16, 1
      %p100 = por %p98, %p99
      %p101 = scmp.ne.s32.totalorder %s90, %s91
      %p102 = scmp.eq.s32.totalorder %s16, 0
      %p103 = por %p101, %p102
      %p104 = scmp.ne.s32.totalorder %s90, %s91
      %p105 = scmp.eq.s32.totalorder %s17, 1
      %p106 = por %p104, %p105
      %p108 = scmp.ne.s32.totalorder %s91, %s107
      %p109 = scmp.eq.s32.totalorder %s17, 0
      %p110 = por %p108, %p109
      %s112 = sadd.s32 %s111, 1
      %p115 = scmp.eq.s32.totalorder %s11, 1
      %p116 = scmp.ne.s32.totalorder %s111, %s113
      %p117 = scmp.eq.s32.totalorder %s11, 0
      %p118 = por %p116, %p117
      %p119 = scmp.ne.s32.totalorder %s111, %s113
      %p120 = scmp.eq.s32.totalorder %s16, 1
      %p121 = por %p119, %p120
      %p122 = scmp.ne.s32.totalorder %s113, %s114
      %p123 = scmp.eq.s32.totalorder %s16, 0
      %p124 = por %p122, %p123
      %p125 = scmp.ne.s32.totalorder %s113, %s114
      %p126 = scmp.eq.s32.totalorder %s17, 1
      %p127 = por %p125, %p126
      %p129 = scmp.ne.s32.totalorder %s114, %s128
      %p130 = scmp.eq.s32.totalorder %s17, 0
      %p131 = por %p129, %p130
      %s133 = sadd.s32 %s132, 1
      %p136 = scmp.eq.s32.totalorder %s11, 1
      %p137 = scmp.ne.s32.totalorder %s132, %s134
      %p138 = scmp.eq.s32.totalorder %s11, 0
      %p139 = por %p137, %p138
      %p140 = scmp.ne.s32.totalorder %s132, %s134
      %p141 = scmp.eq.s32.totalorder %s16, 1
      %p142 = por %p140, %p141
      %p143 = scmp.ne.s32.totalorder %s134, %s135
      %p144 = scmp.eq.s32.totalorder %s16, 0
      %p145 = por %p143, %p144
      %p146 = scmp.ne.s32.totalorder %s134, %s135
      %p147 = scmp.eq.s32.totalorder %s17, 1
      %p148 = por %p146, %p147
      %p150 = scmp.ne.s32.totalorder %s135, %s149
      %p151 = scmp.eq.s32.totalorder %s17, 0
      %p152 = por %p150, %p151
      %s153 = ssub.s32 %s18, %s30
      %p154 = scmp.eq.s32.totalorder %s153, 0
      %s156 = sadd.s32 %s155, 1
      %s157 = scalar_select %p154, %s155, %s156
      %p160 = pneg %p154
      %p161 = scmp.eq.s32.totalorder %s11, 1
      %p162 = por %p160, %p161
      %p163 = scmp.ne.s32.totalorder %s155, %s158
      %p164 = scmp.eq.s32.totalorder %s11, 0
      %p165 = por %p163, %p164
      %p166 = scmp.ne.s32.totalorder %s155, %s158
      %p167 = scmp.eq.s32.totalorder %s16, 1
      %p168 = por %p166, %p167
      %p169 = scmp.ne.s32.totalorder %s158, %s159
      %p170 = scmp.eq.s32.totalorder %s16, 0
      %p171 = por %p169, %p170
      %p172 = scmp.ne.s32.totalorder %s158, %s159
      %p173 = scmp.eq.s32.totalorder %s17, 1
      %p174 = por %p172, %p173
      %p176 = scmp.ne.s32.totalorder %s159, %s175
      %p177 = scmp.eq.s32.totalorder %s17, 0
      %p178 = por %p176, %p177
      %p179 = scmp.le.s32.totalorder 1, %s11
      %p180 = scmp.lt.s32.totalorder %s11, 3
      %p181 = pnand %p179, %p180
      %p182 = pneg %p181
      // Predicated region
      $region9: #{rgcn_forward.3} parent=5 // pred_check
        _
      $region10: #{rgcn_forward.3} parent=5 // pred_check_branch
        %184 = sbr.rel (%p181) target = $region12
      $region11: #{rgcn_forward.3} parent=5 // pred_region
        %s185 = ssub.s32 %s11, 1
        // Predicated region
        $region13: #{rgcn_forward.3} parent=11 // pred_check
          %p186 = pneg %p77
        $region14: #{rgcn_forward.3} parent=11 // pred_check_branch
          %188 = sbr.rel (%p186) target = $region16
        $region15: #{rgcn_forward.3} parent=11 // pred_region
          %s189 = smul.u32 16, %s21
          %p190 = scmp.lt.s32.totalorder %s189, 15
          %s191 = scalar_select %p190, %s189, 15
          %s192 = smul.addr %s191, 4
          %s193 = scalar_lea.vmem %s1, %s192
          %s194 = smul.u32 16, %s21
        $region16: #{rgcn_forward.3} parent=11 // pred_fallthru
          _
        // Predicated region
        $region17: #{rgcn_forward.3} parent=11 // pred_check
          %p195 = pneg %p124
        $region18: #{rgcn_forward.3} parent=11 // pred_check_branch
          %197 = sbr.rel (%p195) target = $region20
        $region19: #{rgcn_forward.3} parent=11 // pred_region
          _
        $region20: #{rgcn_forward.3} parent=11 // pred_fallthru
          _
        // Predicated region
        $region21: #{rgcn_forward.3} parent=11 // pred_check
          %p198 = pneg %p145
        $region22: #{rgcn_forward.3} parent=11 // pred_check_branch
          %200 = sbr.rel (%p198) target = $region24
        $region23: #{rgcn_forward.3} parent=11 // pred_region
          _
        $region24: #{rgcn_forward.3} parent=11 // pred_fallthru
          _
      $region12: #{rgcn_forward.3} parent=5 // pred_fallthru
        _
      %p201 = scmp.lt.s32.totalorder %s11, 2
      // Predicated region
      $region25: #{rgcn_forward.3} parent=5 // pred_check
        %p202 = pneg %p201
      $region26: #{rgcn_forward.3} parent=5 // pred_check_branch
        %204 = sbr.rel (%p202) target = $region28
      $region27: #{rgcn_forward.3} parent=5 // pred_region
        // Predicated region
        $region29: #{rgcn_forward.3} parent=27 // pred_check
          %p205 = pneg %p45
        $region30: #{rgcn_forward.3} parent=27 // pred_check_branch
          %207 = sbr.rel (%p205) target = $region32
        $region31: #{rgcn_forward.3} parent=27 // pred_region
          %s208 = sand.u32 %s35, 1
          %s209 = sand.u32 %s35, 1
          %s210 = smul.addr %s209, 96
          %s211 = scalar_lea.vmem [#allocation3], %s210
          %s212 = smul.u32 8, %s18
          %s213 = sadd.s32 %s19, %s212
          %s214 = smul.addr %s213, 4
          %s215 = scalar_lea.vmem %s0, %s214
          // Predicated region
          $region33: #{rgcn_forward.3} parent=31 // pred_check
            _
          $region34: #{rgcn_forward.3} parent=31 // pred_check_branch
            %217 = sbr.rel (0) target = $region36
          $region35: #{rgcn_forward.3} parent=31 // pred_region
            // Predicated region
            $region37: #{rgcn_forward.3} parent=35 // pred_check
              _
            $region38: #{rgcn_forward.3} parent=35 // pred_check_branch
              %219 = sbr.rel target = $region40
            $region39: #{rgcn_forward.3} parent=35 // pred_region
              // Predicated region
              $region52: #{rgcn_forward.3} parent=39 // pred_check
                _
              $region53: #{rgcn_forward.3} parent=39 // pred_check_branch
                %280 = sbr.rel (0) target = $region55
              $region54: #{rgcn_forward.3} parent=39 // pred_region
                loop: start=0, step=1, limit=1
                $region56: #{rgcn_forward.3} parent=54 // loop_pre_header
                  _
                $region57: #{rgcn_forward.3} parent=54 // loop_header
                  %s282 = sphi 0, %s286
                  %p283 = scmp.ge.s32.totalorder %s282, 1
                  %s287 = sphi %s215, %s215
                  %s288 = sphi %s211, %s211
                $region58: #{rgcn_forward.3} parent=54 // loop_header_branch
                  %285 = sbr.rel (%p283) target = $region62
                $region59: #{rgcn_forward.3} parent=54 // loop_body
                  _
                $region60: #{rgcn_forward.3} parent=54 // loop_footer
                  %s286 = sadd.s32 1, %s282
                $region61: #{rgcn_forward.3} parent=54 // loop_footer_branch
                  %281 = sbr.rel target = $region57
                $region62: #{rgcn_forward.3} parent=54 // loop_exit
                  _
                loop: start=0, step=1, limit=1
                $region63: #{rgcn_forward.3} parent=54 // loop_pre_header
                  _
                $region64: #{rgcn_forward.3} parent=54 // loop_header
                  %s291 = sphi 0, %s295
                  %p292 = scmp.ge.s32.totalorder %s291, 1
                  %s296 = sphi %s215, %s215
                  %s297 = sphi %s211, %s211
                $region65: #{rgcn_forward.3} parent=54 // loop_header_branch
                  %294 = sbr.rel (%p292) target = $region69
                $region66: #{rgcn_forward.3} parent=54 // loop_body
                  %v298 = vld [vmem:[%s296] sm:$0xf]
                  %299 = vst [vmem:[%s297] sm:$0xf] %v298
                  %v300 = vld [vmem:[%s296 + $0x4] sm:$0xf]
                  %301 = vst [vmem:[%s297 + $0x4] sm:$0xf] %v300
                  %v302 = vld [vmem:[%s296 + $0x8] sm:$0xf]
                  %303 = vst [vmem:[%s297 + $0x8] sm:$0xf] %v302
                  %v304 = vld [vmem:[%s296 + $0xc] sm:$0xf]
                  %305 = vst [vmem:[%s297 + $0xc] sm:$0xf] %v304
                  %v306 = vld [vmem:[%s296 + $0x10] sm:$0xf]
                  %307 = vst [vmem:[%s297 + $0x10] sm:$0xf] %v306
                  %v308 = vld [vmem:[%s296 + $0x14] sm:$0xf]
                  %309 = vst [vmem:[%s297 + $0x14] sm:$0xf] %v308
                  %v310 = vld [vmem:[%s296 + $0x18] sm:$0xf]
                  %311 = vst [vmem:[%s297 + $0x18] sm:$0xf] %v310
                  %v312 = vld [vmem:[%s296 + $0x1c] sm:$0xf]
                  %313 = vst [vmem:[%s297 + $0x1c] sm:$0xf] %v312
                  %v314 = vld [vmem:[%s296 + $0x40] sm:$0xf]
                  %315 = vst [vmem:[%s297 + $0x20] sm:$0xf] %v314
                  %v316 = vld [vmem:[%s296 + $0x44] sm:$0xf]
                  %317 = vst [vmem:[%s297 + $0x24] sm:$0xf] %v316
                  %v318 = vld [vmem:[%s296 + $0x48] sm:$0xf]
                  %319 = vst [vmem:[%s297 + $0x28] sm:$0xf] %v318
                  %v320 = vld [vmem:[%s296 + $0x4c] sm:$0xf]
                  %321 = vst [vmem:[%s297 + $0x2c] sm:$0xf] %v320
                  %v322 = vld [vmem:[%s296 + $0x50] sm:$0xf]
                  %323 = vst [vmem:[%s297 + $0x30] sm:$0xf] %v322
                  %v324 = vld [vmem:[%s296 + $0x54] sm:$0xf]
                  %325 = vst [vmem:[%s297 + $0x34] sm:$0xf] %v324
                  %v326 = vld [vmem:[%s296 + $0x58] sm:$0xf]
                  %327 = vst [vmem:[%s297 + $0x38] sm:$0xf] %v326
                  %v328 = vld [vmem:[%s296 + $0x5c] sm:$0xf]
                  %329 = vst [vmem:[%s297 + $0x3c] sm:$0xf] %v328
                  %v330 = vld [vmem:[%s296 + $0x80] sm:$0xf]
                  %331 = vst [vmem:[%s297 + $0x40] sm:$0xf] %v330
                  %v332 = vld [vmem:[%s296 + $0x84] sm:$0xf]
                  %333 = vst [vmem:[%s297 + $0x44] sm:$0xf] %v332
                  %v334 = vld [vmem:[%s296 + $0x88] sm:$0xf]
                  %335 = vst [vmem:[%s297 + $0x48] sm:$0xf] %v334
                  %v336 = vld [vmem:[%s296 + $0x8c] sm:$0xf]
                  %337 = vst [vmem:[%s297 + $0x4c] sm:$0xf] %v336
                  %v338 = vld [vmem:[%s296 + $0x90] sm:$0xf]
                  %339 = vst [vmem:[%s297 + $0x50] sm:$0xf] %v338
                  %v340 = vld [vmem:[%s296 + $0x94] sm:$0xf]
                  %341 = vst [vmem:[%s297 + $0x54] sm:$0xf] %v340
                  %v342 = vld [vmem:[%s296 + $0x98] sm:$0xf]
                  %343 = vst [vmem:[%s297 + $0x58] sm:$0xf] %v342
                  %v344 = vld [vmem:[%s296 + $0x9c] sm:$0xf]
                  %345 = vst [vmem:[%s297 + $0x5c] sm:$0xf] %v344
                $region67: #{rgcn_forward.3} parent=54 // loop_footer
                  %s295 = sadd.s32 1, %s291
                $region68: #{rgcn_forward.3} parent=54 // loop_footer_branch
                  %290 = sbr.rel target = $region64
                $region69: #{rgcn_forward.3} parent=54 // loop_exit
                  _
              $region55: #{rgcn_forward.3} parent=39 // pred_fallthru
                _
            $region40: #{rgcn_forward.3} parent=35 // pred_fallthru
              _
            // Predicated region
            $region41: #{rgcn_forward.3} parent=35 // pred_check
              _
            $region42: #{rgcn_forward.3} parent=35 // pred_check_branch
              %221 = sbr.rel (0) target = $region44
            $region43: #{rgcn_forward.3} parent=35 // pred_region
              loop: start=0, step=1, limit=1
              $region45: #{rgcn_forward.3} parent=43 // loop_pre_header
                _
              $region46: #{rgcn_forward.3} parent=43 // loop_header
                %s224 = sphi 0, %s228
                %p225 = scmp.ge.s32.totalorder %s224, 1
                %s229 = sphi %s215, %s215
                %s230 = sphi %s211, %s211
              $region47: #{rgcn_forward.3} parent=43 // loop_header_branch
                %227 = sbr.rel (%p225) target = $region51
              $region48: #{rgcn_forward.3} parent=43 // loop_body
                %v231 = vld [vmem:[%s229] sm:$0xf]
                %232 = vst [vmem:[%s230] sm:$0xf] %v231
                %v233 = vld [vmem:[%s229 + $0x4] sm:$0xf]
                %234 = vst [vmem:[%s230 + $0x4] sm:$0xf] %v233
                %v235 = vld [vmem:[%s229 + $0x8] sm:$0xf]
                %236 = vst [vmem:[%s230 + $0x8] sm:$0xf] %v235
                %v237 = vld [vmem:[%s229 + $0xc] sm:$0xf]
                %238 = vst [vmem:[%s230 + $0xc] sm:$0xf] %v237
                %v239 = vld [vmem:[%s229 + $0x10] sm:$0xf]
                %240 = vst [vmem:[%s230 + $0x10] sm:$0xf] %v239
                %v241 = vld [vmem:[%s229 + $0x14] sm:$0xf]
                %242 = vst [vmem:[%s230 + $0x14] sm:$0xf] %v241
                %v243 = vld [vmem:[%s229 + $0x18] sm:$0xf]
                %244 = vst [vmem:[%s230 + $0x18] sm:$0xf] %v243
                %v245 = vld [vmem:[%s229 + $0x1c] sm:$0xf]
                %246 = vst [vmem:[%s230 + $0x1c] sm:$0xf] %v245
                %v247 = vld [vmem:[%s229 + $0x40] sm:$0xf]
                %248 = vst [vmem:[%s230 + $0x20] sm:$0xf] %v247
                %v249 = vld [vmem:[%s229 + $0x44] sm:$0xf]
                %250 = vst [vmem:[%s230 + $0x24] sm:$0xf] %v249
                %v251 = vld [vmem:[%s229 + $0x48] sm:$0xf]
                %252 = vst [vmem:[%s230 + $0x28] sm:$0xf] %v251
                %v253 = vld [vmem:[%s229 + $0x4c] sm:$0xf]
                %254 = vst [vmem:[%s230 + $0x2c] sm:$0xf] %v253
                %v255 = vld [vmem:[%s229 + $0x50] sm:$0xf]
                %256 = vst [vmem:[%s230 + $0x30] sm:$0xf] %v255
                %v257 = vld [vmem:[%s229 + $0x54] sm:$0xf]
                %258 = vst [vmem:[%s230 + $0x34] sm:$0xf] %v257
                %v259 = vld [vmem:[%s229 + $0x58] sm:$0xf]
                %260 = vst [vmem:[%s230 + $0x38] sm:$0xf] %v259
                %v261 = vld [vmem:[%s229 + $0x5c] sm:$0xf]
                %262 = vst [vmem:[%s230 + $0x3c] sm:$0xf] %v261
                %v263 = vld [vmem:[%s229 + $0x80] sm:$0xf]
                %264 = vst [vmem:[%s230 + $0x40] sm:$0xf] %v263
                %v265 = vld [vmem:[%s229 + $0x84] sm:$0xf]
                %266 = vst [vmem:[%s230 + $0x44] sm:$0xf] %v265
                %v267 = vld [vmem:[%s229 + $0x88] sm:$0xf]
                %268 = vst [vmem:[%s230 + $0x48] sm:$0xf] %v267
                %v269 = vld [vmem:[%s229 + $0x8c] sm:$0xf]
                %270 = vst [vmem:[%s230 + $0x4c] sm:$0xf] %v269
                %v271 = vld [vmem:[%s229 + $0x90] sm:$0xf]
                %272 = vst [vmem:[%s230 + $0x50] sm:$0xf] %v271
                %v273 = vld [vmem:[%s229 + $0x94] sm:$0xf]
                %274 = vst [vmem:[%s230 + $0x54] sm:$0xf] %v273
                %v275 = vld [vmem:[%s229 + $0x98] sm:$0xf]
                %276 = vst [vmem:[%s230 + $0x58] sm:$0xf] %v275
                %v277 = vld [vmem:[%s229 + $0x9c] sm:$0xf]
                %278 = vst [vmem:[%s230 + $0x5c] sm:$0xf] %v277
              $region49: #{rgcn_forward.3} parent=43 // loop_footer
                %s228 = sadd.s32 1, %s224
              $region50: #{rgcn_forward.3} parent=43 // loop_footer_branch
                %223 = sbr.rel target = $region46
              $region51: #{rgcn_forward.3} parent=43 // loop_exit
                _
            $region44: #{rgcn_forward.3} parent=35 // pred_fallthru
              _
          $region36: #{rgcn_forward.3} parent=31 // pred_fallthru
            _
          %346 = vnop
        $region32: #{rgcn_forward.3} parent=27 // pred_fallthru
          _
        // Predicated region
        $region70: #{rgcn_forward.3} parent=27 // pred_check
          %p347 = pneg %p97
        $region71: #{rgcn_forward.3} parent=27 // pred_check_branch
          %349 = sbr.rel (%p347) target = $region73
        $region72: #{rgcn_forward.3} parent=27 // pred_region
          %s350 = smul.u32 8, %s18
          %p351 = scmp.lt.s32.totalorder %s350, 15
          %s352 = scalar_select %p351, %s350, 15
          %s353 = smul.addr %s352, 4
          %s354 = scalar_lea.vmem %s2, %s353
          %s355 = smul.u32 8, %s18
        $region73: #{rgcn_forward.3} parent=27 // pred_fallthru
          _
      $region28: #{rgcn_forward.3} parent=5 // pred_fallthru
        _
      %p356 = scmp.le.s32.totalorder 1, %s11
      %p357 = scmp.lt.s32.totalorder %s11, 3
      %p358 = pnand %p356, %p357
      %p359 = pneg %p358
      // Predicated region
      $region74: #{rgcn_forward.3} parent=5 // pred_check
        _
      $region75: #{rgcn_forward.3} parent=5 // pred_check_branch
        %361 = sbr.rel (%p358) target = $region77
      $region76: #{rgcn_forward.3} parent=5 // pred_region
        %s362 = ssub.s32 %s11, 1
        %s363 = sand.u32 %s38, 1
        %s364 = sand.u32 %s38, 1
        %s365 = smul.addr %s364, 96
        %s366 = scalar_lea.vmem [#allocation3], %s365
        // Predicated region
        $region78: #{rgcn_forward.3} parent=76 // pred_check
          %p367 = pneg %p51
        $region79: #{rgcn_forward.3} parent=76 // pred_check_branch
          %369 = sbr.rel (%p367) target = $region81
        $region80: #{rgcn_forward.3} parent=76 // pred_region
          _
        $region81: #{rgcn_forward.3} parent=76 // pred_fallthru
          _
        %s370 = sand.u32 %s38, 1
        %s371 = sand.u32 %s38, 1
        %s372 = smul.addr %s371, 96
        %s373 = scalar_lea.vmem [#allocation3], %s372
        %p374 = pneg %p51
        %p375 = pneg %p48
        %s376 = smul.u32 16, %s21
        %p377 = scmp.lt.s32.totalorder %s376, 15
        %s378 = scalar_select %p377, %s376, 15
        %s379 = smul.addr %s378, 4
        %s380 = scalar_lea.vmem %s1, %s379
        %p381 = pneg %p77
        %p382 = pneg %p74
        %s383 = smul.u32 8, %s20
        %p384 = scmp.lt.s32.totalorder %s383, 15
        %s385 = scalar_select %p384, %s383, 15
        %s386 = smul.addr %s385, 4
        %s387 = scalar_lea.vmem %s2, %s386
        %p388 = pneg %p103
        %p389 = pneg %p100
        %p390 = pneg %p124
        %p391 = pneg %p121
        %p392 = pneg %p145
        %p393 = pneg %p142
        %p394 = pneg %p171
        %p395 = pneg %p168
        %s396 = smul.u32 8, %s20
        %p397 = scmp.lt.s32.totalorder %s396, 15
        %s398 = scalar_select %p397, %s396, 15
        %s399 = smul.addr %s398, 8
        %s400 = scalar_lea.vmem %s5, %s399
        %s401 = smul.u32 8, %s20
        %s402 = smul.u32 16, %s21
        %p403 = scmp.lt.s32.totalorder %s402, 15
        %s404 = scalar_select %p403, %s402, 15
        %s405 = smul.addr %s404, 4
        %s406 = scalar_lea.vmem %s1, %s405
        %s407 = smul.u32 16, %s21
        %s408 = smul.u32 8, %s20
        %p409 = scmp.lt.s32.totalorder %s408, 15
        %s410 = scalar_select %p409, %s408, 15
        %s411 = smul.addr %s410, 4
        %s412 = scalar_lea.vmem %s2, %s411
        %s413 = smul.u32 8, %s20
        %s414 = smul.u32 8, %s20
        %p415 = scmp.lt.s32.totalorder %s414, 15
        %s416 = scalar_select %p415, %s414, 15
        %s417 = smul.addr %s416, 8
        %s418 = scalar_lea.vmem %s5, %s417
        %s419 = smul.u32 8, %s20
        %p421 = scmp.eq.s32.totalorder %s21, 0
        // Predicated region
        $region82: #{rgcn_forward.3} parent=76 // pred_check
          %p422 = pneg %p421
        $region83: #{rgcn_forward.3} parent=76 // pred_check_branch
          %424 = sbr.rel (%p422) target = $region85
        $region84: #{rgcn_forward.3} parent=76 // pred_region
          %425 = vst [vmem:[#allocation2] sm:$0xff] 0.0
          %426 = vst [vmem:[#allocation2 + $0x8] sm:$0xff] 0.0
          %427 = vst [vmem:[#allocation2 + $0x10] sm:$0xff] 0.0
          %428 = vst [vmem:[#allocation2 + $0x18] sm:$0xff] 0.0
          %429 = vst [vmem:[#allocation2 + $0x20] sm:$0xff] 0.0
          %430 = vst [vmem:[#allocation2 + $0x28] sm:$0xff] 0.0
          %431 = vst [vmem:[#allocation2 + $0x30] sm:$0xff] 0.0
          %432 = vst [vmem:[#allocation2 + $0x38] sm:$0xff] 0.0
          %433 = vst [vmem:[#allocation2 + $0x40] sm:$0xff] 0.0
          %434 = vst [vmem:[#allocation2 + $0x48] sm:$0xff] 0.0
          %435 = vst [vmem:[#allocation2 + $0x50] sm:$0xff] 0.0
          %436 = vst [vmem:[#allocation2 + $0x58] sm:$0xff] 0.0
          %437 = vst [vmem:[#allocation2 + $0x60] sm:$0xff] 0.0
          %438 = vst [vmem:[#allocation2 + $0x68] sm:$0xff] 0.0
          %439 = vst [vmem:[#allocation2 + $0x70] sm:$0xff] 0.0
          %440 = vst [vmem:[#allocation2 + $0x78] sm:$0xff] 0.0
          %441 = vst [vmem:[#allocation2 + $0x80] sm:$0xff] 0.0
          %442 = vst [vmem:[#allocation2 + $0x88] sm:$0xff] 0.0
          %443 = vst [vmem:[#allocation2 + $0x90] sm:$0xff] 0.0
          %444 = vst [vmem:[#allocation2 + $0x98] sm:$0xff] 0.0
          %445 = vst [vmem:[#allocation2 + $0xa0] sm:$0xff] 0.0
          %446 = vst [vmem:[#allocation2 + $0xa8] sm:$0xff] 0.0
          %447 = vst [vmem:[#allocation2 + $0xb0] sm:$0xff] 0.0
          %448 = vst [vmem:[#allocation2 + $0xb8] sm:$0xff] 0.0
        $region85: #{rgcn_forward.3} parent=76 // pred_fallthru
          _
        %v449 = vld [vmem:[%s406] sm:$0xf]
        %v450 = vld [vmem:[%s406 + $0x4] sm:$0xf]
        %v451 = vld [vmem:[%s406 + $0x8] sm:$0xf]
        %v452 = vld [vmem:[%s406 + $0xc] sm:$0xf]
        %v453 = vld [vmem:[%s406 + $0x10] sm:$0xf]
        %v454 = vld [vmem:[%s406 + $0x14] sm:$0xf]
        %v455 = vld [vmem:[%s406 + $0x18] sm:$0xf]
        %v456 = vld [vmem:[%s406 + $0x1c] sm:$0xf]
        %v457 = vld [vmem:[%s406 + $0x20] sm:$0xf]
        %v458 = vld [vmem:[%s406 + $0x24] sm:$0xf]
        %v459 = vld [vmem:[%s406 + $0x28] sm:$0xf]
        %v460 = vld [vmem:[%s406 + $0x2c] sm:$0xf]
        %v461 = vld [vmem:[%s406 + $0x30] sm:$0xf]
        %v462 = vld [vmem:[%s406 + $0x34] sm:$0xf]
        %v463 = vld [vmem:[%s406 + $0x38] sm:$0xf]
        %v464 = vld [vmem:[%s406 + $0x3c] sm:$0xf]
        %v465 = vld [vmem:[#allocation2] sm:$0xff]
        %v466 = vld [vmem:[#allocation2 + $0x8] sm:$0xff]
        %v467 = vld [vmem:[#allocation2 + $0x10] sm:$0xff]
        %v468 = vld [vmem:[#allocation2 + $0x18] sm:$0xff]
        %v469 = vld [vmem:[#allocation2 + $0x20] sm:$0xff]
        %v470 = vld [vmem:[#allocation2 + $0x28] sm:$0xff]
        %v471 = vld [vmem:[#allocation2 + $0x30] sm:$0xff]
        %v472 = vld [vmem:[#allocation2 + $0x38] sm:$0xff]
        %v473 = vld [vmem:[%s366] sm:$0xf]
        %v474 = vld [vmem:[%s366 + $0x4] sm:$0xf]
        %v475 = vld [vmem:[%s366 + $0x8] sm:$0xf]
        %v476 = vld [vmem:[%s366 + $0xc] sm:$0xf]
        %v477 = vld [vmem:[%s366 + $0x10] sm:$0xf]
        %v478 = vld [vmem:[%s366 + $0x14] sm:$0xf]
        %v479 = vld [vmem:[%s366 + $0x18] sm:$0xf]
        %v480 = vld [vmem:[%s366 + $0x1c] sm:$0xf]
        %v489 = vunpack.c.l.b16 %v473
        %v490 = vunpack.c.l.b16 %v474
        %v491 = vunpack.c.l.b16 %v475
        %v492 = vunpack.c.l.b16 %v476
        %v493 = vunpack.c.l.b16 %v477
        %v494 = vunpack.c.l.b16 %v478
        %v495 = vunpack.c.l.b16 %v479
        %v496 = vunpack.c.l.b16 %v480
        %v497 = vpack.c.b16 %v490, %v489
        %v498 = vpack.c.b16 %v492, %v491
        %v499 = vpack.c.b16 %v494, %v493
        %v500 = vpack.c.b16 %v496, %v495
        %v521 = vunpack.c.l.b16 %v449
        %v522 = vunpack.c.l.b16 %v450
        %v523 = vunpack.c.l.b16 %v451
        %v524 = vunpack.c.l.b16 %v452
        %v525 = vunpack.c.l.b16 %v453
        %v526 = vunpack.c.l.b16 %v454
        %v527 = vunpack.c.l.b16 %v455
        %v528 = vunpack.c.l.b16 %v456
        %v529 = vunpack.c.l.b16 %v457
        %v530 = vunpack.c.l.b16 %v458
        %v531 = vunpack.c.l.b16 %v459
        %v532 = vunpack.c.l.b16 %v460
        %v533 = vunpack.c.l.b16 %v461
        %v534 = vunpack.c.l.b16 %v462
        %v535 = vunpack.c.l.b16 %v463
        %v536 = vunpack.c.l.b16 %v464
        %v537 = vpack.c.b16 %v522, %v521
        %v538 = vpack.c.b16 %v524, %v523
        %v539 = vpack.c.b16 %v526, %v525
        %v540 = vpack.c.b16 %v528, %v527
        %v541 = vpack.c.b16 %v530, %v529
        %v542 = vpack.c.b16 %v532, %v531
        %v543 = vpack.c.b16 %v534, %v533
        %v544 = vpack.c.b16 %v536, %v535
        %553 = vmatprep.subr.bf16.mxu0 0
        %554 = vmatpush1.bf16.msra.mxu0 %v537
        %555 = vmatprep.subr.bf16.mxu0 0
        %556 = vmatpush1.bf16.msra.mxu0 %v538
        %557 = vmatprep.subr.bf16.mxu0 0
        %558 = vmatpush1.bf16.msra.mxu0 %v539
        %559 = vmatprep.subr.bf16.mxu0 0
        %560 = vmatpush1.bf16.msra.mxu0 %v540
        %561 = vmatprep.subr.bf16.mxu0 0
        %562 = vmatpush1.bf16.msra.mxu0 %v541
        %563 = vmatprep.subr.bf16.mxu0 0
        %564 = vmatpush1.bf16.msra.mxu0 %v542
        %565 = vmatprep.subr.bf16.mxu0 0
        %566 = vmatpush1.bf16.msra.mxu0 %v543
        %567 = vmatprep.subr.bf16.mxu0 0
        %568 = vmatpush1.bf16.msra.mxu0 %v544
        %569 = vmatprep.subr.bf16.mxu0 0
        %570 = vmatpush1.bf16.msra.mxu0 0
        %571 = vmatprep.subr.bf16.mxu0 0
        %572 = vmatpush1.bf16.msra.mxu0 0
        %573 = vmatprep.subr.bf16.mxu0 0
        %574 = vmatpush1.bf16.msra.mxu0 0
        %575 = vmatprep.subr.bf16.mxu0 0
        %576 = vmatpush1.bf16.msra.mxu0 0
        %577 = vmatprep.subr.bf16.mxu0 0
        %578 = vmatpush1.bf16.msra.mxu0 0
        %579 = vmatprep.subr.bf16.mxu0 0
        %580 = vmatpush1.bf16.msra.mxu0 0
        %581 = vmatprep.subr.bf16.mxu0 0
        %582 = vmatpush1.bf16.msra.mxu0 0
        %583 = vmatprep.subr.bf16.mxu0 0
        %584 = vmatpush1.bf16.msra.mxu0 0
        %585 = vmatprep.mubr.bf16.mxu0 0
        %586 = vmatmul.mubr.bf16.gmra.mrb[0].mxu0 %v497
        %v587 = vpop.f32.mrb[0].mxu0
        %v588 = vadd.f32 0.0, %v587
        %v589 = vpop.f32.mrb[0].mxu0
        %v590 = vpop.f32.mrb[0].mxu0
        %v591 = vadd.f32 0.0, %v590
        %v592 = vpop.f32.mrb[0].mxu0
        %593 = vmatprep.mubr.bf16.mxu0 0
        %594 = vmatmul.mubr.bf16.gmra.mrb[0].mxu0 %v498
        %v595 = vpop.f32.mrb[0].mxu0
        %v596 = vadd.f32 0.0, %v595
        %v597 = vpop.f32.mrb[0].mxu0
        %v598 = vpop.f32.mrb[0].mxu0
        %v599 = vadd.f32 0.0, %v598
        %v600 = vpop.f32.mrb[0].mxu0
        %601 = vmatprep.mubr.bf16.mxu0 0
        %602 = vmatmul.mubr.bf16.gmra.mrb[0].mxu0 %v499
        %v603 = vpop.f32.mrb[0].mxu0
        %v604 = vadd.f32 0.0, %v603
        %v605 = vpop.f32.mrb[0].mxu0
        %v606 = vpop.f32.mrb[0].mxu0
        %v607 = vadd.f32 0.0, %v606
        %v608 = vpop.f32.mrb[0].mxu0
        %609 = vmatprep.mubr.bf16.mxu0 0
        %610 = vmatmul.mubr.bf16.gmra.mrb[0].mxu0 %v500
        %v611 = vpop.f32.mrb[0].mxu0
        %v612 = vadd.f32 0.0, %v611
        %v613 = vpop.f32.mrb[0].mxu0
        %v614 = vpop.f32.mrb[0].mxu0
        %v615 = vadd.f32 0.0, %v614
        %v616 = vpop.f32.mrb[0].mxu0
        %617 = vdwg.mxu0
        %v618 = vadd.f32 %v465, %v588
        %v619 = vadd.f32 %v466, %v591
        %v620 = vadd.f32 %v467, %v596
        %v621 = vadd.f32 %v468, %v599
        %v622 = vadd.f32 %v469, %v604
        %v623 = vadd.f32 %v470, %v607
        %v624 = vadd.f32 %v471, %v612
        %v625 = vadd.f32 %v472, %v615
        %626 = vst [vmem:[#allocation2] sm:$0xff] %v618
        %627 = vst [vmem:[#allocation2 + $0x8] sm:$0xff] %v619
        %628 = vst [vmem:[#allocation2 + $0x10] sm:$0xff] %v620
        %629 = vst [vmem:[#allocation2 + $0x18] sm:$0xff] %v621
        %630 = vst [vmem:[#allocation2 + $0x20] sm:$0xff] %v622
        %631 = vst [vmem:[#allocation2 + $0x28] sm:$0xff] %v623
        %632 = vst [vmem:[#allocation2 + $0x30] sm:$0xff] %v624
        %633 = vst [vmem:[#allocation2 + $0x38] sm:$0xff] %v625
        %s634 = scalar_lea.vmem [#allocation2], 64
        %v635 = vld [vmem:[%s634] sm:$0xff]
        %v636 = vld [vmem:[%s634 + $0x8] sm:$0xff]
        %v637 = vld [vmem:[%s634 + $0x10] sm:$0xff]
        %v638 = vld [vmem:[%s634 + $0x18] sm:$0xff]
        %v639 = vld [vmem:[%s634 + $0x20] sm:$0xff]
        %v640 = vld [vmem:[%s634 + $0x28] sm:$0xff]
        %v641 = vld [vmem:[%s634 + $0x30] sm:$0xff]
        %v642 = vld [vmem:[%s634 + $0x38] sm:$0xff]
        %s643 = scalar_lea.vmem %s366, 32 [#allocation3]
        %v644 = vld [vmem:[%s643] sm:$0xf]
        %v645 = vld [vmem:[%s643 + $0x4] sm:$0xf]
        %v646 = vld [vmem:[%s643 + $0x8] sm:$0xf]
        %v647 = vld [vmem:[%s643 + $0xc] sm:$0xf]
        %v648 = vld [vmem:[%s643 + $0x10] sm:$0xf]
        %v649 = vld [vmem:[%s643 + $0x14] sm:$0xf]
        %v650 = vld [vmem:[%s643 + $0x18] sm:$0xf]
        %v651 = vld [vmem:[%s643 + $0x1c] sm:$0xf]
        %v660 = vunpack.c.l.b16 %v644
        %v661 = vunpack.c.l.b16 %v645
        %v662 = vunpack.c.l.b16 %v646
        %v663 = vunpack.c.l.b16 %v647
        %v664 = vunpack.c.l.b16 %v648
        %v665 = vunpack.c.l.b16 %v649
        %v666 = vunpack.c.l.b16 %v650
        %v667 = vunpack.c.l.b16 %v651
        %v668 = vpack.c.b16 %v661, %v660
        %v669 = vpack.c.b16 %v663, %v662
        %v670 = vpack.c.b16 %v665, %v664
        %v671 = vpack.c.b16 %v667, %v666
        %676 = vmatprep.subr.bf16.mxu0 0
        %677 = vmatpush1.bf16.msra.mxu0 %v537
        %678 = vmatprep.subr.bf16.mxu0 0
        %679 = vmatpush1.bf16.msra.mxu0 %v538
        %680 = vmatprep.subr.bf16.mxu0 0
        %681 = vmatpush1.bf16.msra.mxu0 %v539
        %682 = vmatprep.subr.bf16.mxu0 0
        %683 = vmatpush1.bf16.msra.mxu0 %v540
        %684 = vmatprep.subr.bf16.mxu0 0
        %685 = vmatpush1.bf16.msra.mxu0 %v541
        %686 = vmatprep.subr.bf16.mxu0 0
        %687 = vmatpush1.bf16.msra.mxu0 %v542
        %688 = vmatprep.subr.bf16.mxu0 0
        %689 = vmatpush1.bf16.msra.mxu0 %v543
        %690 = vmatprep.subr.bf16.mxu0 0
        %691 = vmatpush1.bf16.msra.mxu0 %v544
        %692 = vmatprep.subr.bf16.mxu0 0
        %693 = vmatpush1.bf16.msra.mxu0 0
        %694 = vmatprep.subr.bf16.mxu0 0
        %695 = vmatpush1.bf16.msra.mxu0 0
        %696 = vmatprep.subr.bf16.mxu0 0
        %697 = vmatpush1.bf16.msra.mxu0 0
        %698 = vmatprep.subr.bf16.mxu0 0
        %699 = vmatpush1.bf16.msra.mxu0 0
        %700 = vmatprep.subr.bf16.mxu0 0
        %701 = vmatpush1.bf16.msra.mxu0 0
        %702 = vmatprep.subr.bf16.mxu0 0
        %703 = vmatpush1.bf16.msra.mxu0 0
        %704 = vmatprep.subr.bf16.mxu0 0
        %705 = vmatpush1.bf16.msra.mxu0 0
        %706 = vmatprep.subr.bf16.mxu0 0
        %707 = vmatpush1.bf16.msra.mxu0 0
        %708 = vmatprep.mubr.bf16.mxu0 0
        %709 = vmatmul.mubr.bf16.gmra.mrb[0].mxu0 %v668
        %v710 = vpop.f32.mrb[0].mxu0
        %v711 = vadd.f32 0.0, %v710
        %v712 = vpop.f32.mrb[0].mxu0
        %v713 = vpop.f32.mrb[0].mxu0
        %v714 = vadd.f32 0.0, %v713
        %v715 = vpop.f32.mrb[0].mxu0
        %716 = vmatprep.mubr.bf16.mxu0 0
        %717 = vmatmul.mubr.bf16.gmra.mrb[0].mxu0 %v669
        %v718 = vpop.f32.mrb[0].mxu0
        %v719 = vadd.f32 0.0, %v718
        %v720 = vpop.f32.mrb[0].mxu0
        %v721 = vpop.f32.mrb[0].mxu0
        %v722 = vadd.f32 0.0, %v721
        %v723 = vpop.f32.mrb[0].mxu0
        %724 = vmatprep.mubr.bf16.mxu0 0
        %725 = vmatmul.mubr.bf16.gmra.mrb[0].mxu0 %v670
        %v726 = vpop.f32.mrb[0].mxu0
        %v727 = vadd.f32 0.0, %v726
        %v728 = vpop.f32.mrb[0].mxu0
        %v729 = vpop.f32.mrb[0].mxu0
        %v730 = vadd.f32 0.0, %v729
        %v731 = vpop.f32.mrb[0].mxu0
        %732 = vmatprep.mubr.bf16.mxu0 0
        %733 = vmatmul.mubr.bf16.gmra.mrb[0].mxu0 %v671
        %v734 = vpop.f32.mrb[0].mxu0
        %v735 = vadd.f32 0.0, %v734
        %v736 = vpop.f32.mrb[0].mxu0
        %v737 = vpop.f32.mrb[0].mxu0
        %v738 = vadd.f32 0.0, %v737
        %v739 = vpop.f32.mrb[0].mxu0
        %740 = vdwg.mxu0
        %v741 = vadd.f32 %v635, %v711
        %v742 = vadd.f32 %v636, %v714
        %v743 = vadd.f32 %v637, %v719
        %v744 = vadd.f32 %v638, %v722
        %v745 = vadd.f32 %v639, %v727
        %v746 = vadd.f32 %v640, %v730
        %v747 = vadd.f32 %v641, %v735
        %v748 = vadd.f32 %v642, %v738
        %749 = vst [vmem:[%s634] sm:$0xff] %v741
        %750 = vst [vmem:[%s634 + $0x8] sm:$0xff] %v742
        %751 = vst [vmem:[%s634 + $0x10] sm:$0xff] %v743
        %752 = vst [vmem:[%s634 + $0x18] sm:$0xff] %v744
        %753 = vst [vmem:[%s634 + $0x20] sm:$0xff] %v745
        %754 = vst [vmem:[%s634 + $0x28] sm:$0xff] %v746
        %755 = vst [vmem:[%s634 + $0x30] sm:$0xff] %v747
        %756 = vst [vmem:[%s634 + $0x38] sm:$0xff] %v748
        %s757 = scalar_lea.vmem [#allocation2], 128
        %v758 = vld [vmem:[%s757] sm:$0xff]
        %v759 = vld [vmem:[%s757 + $0x8] sm:$0xff]
        %v760 = vld [vmem:[%s757 + $0x10] sm:$0xff]
        %v761 = vld [vmem:[%s757 + $0x18] sm:$0xff]
        %v762 = vld [vmem:[%s757 + $0x20] sm:$0xff]
        %v763 = vld [vmem:[%s757 + $0x28] sm:$0xff]
        %v764 = vld [vmem:[%s757 + $0x30] sm:$0xff]
        %v765 = vld [vmem:[%s757 + $0x38] sm:$0xff]
        %s766 = scalar_lea.vmem %s366, 64 [#allocation3]
        %v767 = vld [vmem:[%s766] sm:$0xf]
        %v768 = vld [vmem:[%s766 + $0x4] sm:$0xf]
        %v769 = vld [vmem:[%s766 + $0x8] sm:$0xf]
        %v770 = vld [vmem:[%s766 + $0xc] sm:$0xf]
        %v771 = vld [vmem:[%s766 + $0x10] sm:$0xf]
        %v772 = vld [vmem:[%s766 + $0x14] sm:$0xf]
        %v773 = vld [vmem:[%s766 + $0x18] sm:$0xf]
        %v774 = vld [vmem:[%s766 + $0x1c] sm:$0xf]
        %v783 = vunpack.c.l.b16 %v767
        %v784 = vunpack.c.l.b16 %v768
        %v785 = vunpack.c.l.b16 %v769
        %v786 = vunpack.c.l.b16 %v770
        %v787 = vunpack.c.l.b16 %v771
        %v788 = vunpack.c.l.b16 %v772
        %v789 = vunpack.c.l.b16 %v773
        %v790 = vunpack.c.l.b16 %v774
        %v791 = vpack.c.b16 %v784, %v783
        %v792 = vpack.c.b16 %v786, %v785
        %v793 = vpack.c.b16 %v788, %v787
        %v794 = vpack.c.b16 %v790, %v789
        %799 = vmatprep.subr.bf16.mxu0 0
        %800 = vmatpush1.bf16.msra.mxu0 %v537
        %801 = vmatprep.subr.bf16.mxu0 0
        %802 = vmatpush1.bf16.msra.mxu0 %v538
        %803 = vmatprep.subr.bf16.mxu0 0
        %804 = vmatpush1.bf16.msra.mxu0 %v539
        %805 = vmatprep.subr.bf16.mxu0 0
        %806 = vmatpush1.bf16.msra.mxu0 %v540
        %807 = vmatprep.subr.bf16.mxu0 0
        %808 = vmatpush1.bf16.msra.mxu0 %v541
        %809 = vmatprep.subr.bf16.mxu0 0
        %810 = vmatpush1.bf16.msra.mxu0 %v542
        %811 = vmatprep.subr.bf16.mxu0 0
        %812 = vmatpush1.bf16.msra.mxu0 %v543
        %813 = vmatprep.subr.bf16.mxu0 0
        %814 = vmatpush1.bf16.msra.mxu0 %v544
        %815 = vmatprep.subr.bf16.mxu0 0
        %816 = vmatpush1.bf16.msra.mxu0 0
        %817 = vmatprep.subr.bf16.mxu0 0
        %818 = vmatpush1.bf16.msra.mxu0 0
        %819 = vmatprep.subr.bf16.mxu0 0
        %820 = vmatpush1.bf16.msra.mxu0 0
        %821 = vmatprep.subr.bf16.mxu0 0
        %822 = vmatpush1.bf16.msra.mxu0 0
        %823 = vmatprep.subr.bf16.mxu0 0
        %824 = vmatpush1.bf16.msra.mxu0 0
        %825 = vmatprep.subr.bf16.mxu0 0
        %826 = vmatpush1.bf16.msra.mxu0 0
        %827 = vmatprep.subr.bf16.mxu0 0
        %828 = vmatpush1.bf16.msra.mxu0 0
        %829 = vmatprep.subr.bf16.mxu0 0
        %830 = vmatpush1.bf16.msra.mxu0 0
        %831 = vmatprep.mubr.bf16.mxu0 0
        %832 = vmatmul.mubr.bf16.gmra.mrb[0].mxu0 %v791
        %v833 = vpop.f32.mrb[0].mxu0
        %v834 = vadd.f32 0.0, %v833
        %v835 = vpop.f32.mrb[0].mxu0
        %v836 = vpop.f32.mrb[0].mxu0
        %v837 = vadd.f32 0.0, %v836
        %v838 = vpop.f32.mrb[0].mxu0
        %839 = vmatprep.mubr.bf16.mxu0 0
        %840 = vmatmul.mubr.bf16.gmra.mrb[0].mxu0 %v792
        %v841 = vpop.f32.mrb[0].mxu0
        %v842 = vadd.f32 0.0, %v841
        %v843 = vpop.f32.mrb[0].mxu0
        %v844 = vpop.f32.mrb[0].mxu0
        %v845 = vadd.f32 0.0, %v844
        %v846 = vpop.f32.mrb[0].mxu0
        %847 = vmatprep.mubr.bf16.mxu0 0
        %848 = vmatmul.mubr.bf16.gmra.mrb[0].mxu0 %v793
        %v849 = vpop.f32.mrb[0].mxu0
        %v850 = vadd.f32 0.0, %v849
        %v851 = vpop.f32.mrb[0].mxu0
        %v852 = vpop.f32.mrb[0].mxu0
        %v853 = vadd.f32 0.0, %v852
        %v854 = vpop.f32.mrb[0].mxu0
        %855 = vmatprep.mubr.bf16.mxu0 0
        %856 = vmatmul.mubr.bf16.gmra.mrb[0].mxu0 %v794
        %v857 = vpop.f32.mrb[0].mxu0
        %v858 = vadd.f32 0.0, %v857
        %v859 = vpop.f32.mrb[0].mxu0
        %v860 = vpop.f32.mrb[0].mxu0
        %v861 = vadd.f32 0.0, %v860
        %v862 = vpop.f32.mrb[0].mxu0
        %863 = vdwg.mxu0
        %v864 = vadd.f32 %v758, %v834
        %v865 = vadd.f32 %v759, %v837
        %v866 = vadd.f32 %v760, %v842
        %v867 = vadd.f32 %v761, %v845
        %v868 = vadd.f32 %v762, %v850
        %v869 = vadd.f32 %v763, %v853
        %v870 = vadd.f32 %v764, %v858
        %v871 = vadd.f32 %v765, %v861
        %872 = vst [vmem:[%s757] sm:$0xff] %v864
        %873 = vst [vmem:[%s757 + $0x8] sm:$0xff] %v865
        %874 = vst [vmem:[%s757 + $0x10] sm:$0xff] %v866
        %875 = vst [vmem:[%s757 + $0x18] sm:$0xff] %v867
        %876 = vst [vmem:[%s757 + $0x20] sm:$0xff] %v868
        %877 = vst [vmem:[%s757 + $0x28] sm:$0xff] %v869
        %878 = vst [vmem:[%s757 + $0x30] sm:$0xff] %v870
        %879 = vst [vmem:[%s757 + $0x38] sm:$0xff] %v871
        // Predicated region
        $region86: #{rgcn_forward.3} parent=76 // pred_check
          %p880 = pneg %p421
        $region87: #{rgcn_forward.3} parent=76 // pred_check_branch
          %882 = sbr.rel (%p880) target = $region89
        $region88: #{rgcn_forward.3} parent=76 // pred_region
          %v883 = vld [vmem:[#allocation2] sm:$0xff]
          %v884 = vld [vmem:[#allocation2 + $0x8] sm:$0xff]
          %v885 = vld [vmem:[#allocation2 + $0x10] sm:$0xff]
          %v886 = vld [vmem:[#allocation2 + $0x18] sm:$0xff]
          %v887 = vld [vmem:[#allocation2 + $0x20] sm:$0xff]
          %v888 = vld [vmem:[#allocation2 + $0x28] sm:$0xff]
          %v889 = vld [vmem:[#allocation2 + $0x30] sm:$0xff]
          %v890 = vld [vmem:[#allocation2 + $0x38] sm:$0xff]
          %v891 = vpack.c.bf16 %v884, %v883
          %v892 = vpack.c.bf16 %v886, %v885
          %v893 = vpack.c.bf16 %v888, %v887
          %v894 = vpack.c.bf16 %v890, %v889
          %v895 = vld [vmem:[%s634] sm:$0xff]
          %v896 = vld [vmem:[%s634 + $0x8] sm:$0xff]
          %v897 = vld [vmem:[%s634 + $0x10] sm:$0xff]
          %v898 = vld [vmem:[%s634 + $0x18] sm:$0xff]
          %v899 = vld [vmem:[%s634 + $0x20] sm:$0xff]
          %v900 = vld [vmem:[%s634 + $0x28] sm:$0xff]
          %v901 = vld [vmem:[%s634 + $0x30] sm:$0xff]
          %v902 = vld [vmem:[%s634 + $0x38] sm:$0xff]
          %v903 = vpack.c.bf16 %v896, %v895
          %v904 = vpack.c.bf16 %v898, %v897
          %v905 = vpack.c.bf16 %v900, %v899
          %v906 = vpack.c.bf16 %v902, %v901
          %v907 = vld [vmem:[%s757] sm:$0xff]
          %v908 = vld [vmem:[%s757 + $0x8] sm:$0xff]
          %v909 = vld [vmem:[%s757 + $0x10] sm:$0xff]
          %v910 = vld [vmem:[%s757 + $0x18] sm:$0xff]
          %v911 = vld [vmem:[%s757 + $0x20] sm:$0xff]
          %v912 = vld [vmem:[%s757 + $0x28] sm:$0xff]
          %v913 = vld [vmem:[%s757 + $0x30] sm:$0xff]
          %v914 = vld [vmem:[%s757 + $0x38] sm:$0xff]
          %v915 = vpack.c.bf16 %v908, %v907
          %v916 = vpack.c.bf16 %v910, %v909
          %v917 = vpack.c.bf16 %v912, %v911
          %v918 = vpack.c.bf16 %v914, %v913
          %v919 = vld [vmem:[%s412] sm:$0xf]
          %v920 = vld [vmem:[%s412 + $0x4] sm:$0xf]
          %v921 = vld [vmem:[%s412 + $0x8] sm:$0xf]
          %v922 = vld [vmem:[%s412 + $0xc] sm:$0xf]
          %v923 = vld [vmem:[%s412 + $0x10] sm:$0xf]
          %v924 = vld [vmem:[%s412 + $0x14] sm:$0xf]
          %v925 = vld [vmem:[%s412 + $0x18] sm:$0xf]
          %v926 = vld [vmem:[%s412 + $0x1c] sm:$0xf]
          %v935 = vunpack.c.l.b16 %v919
          %v936 = vunpack.c.l.b16 %v920
          %v937 = vunpack.c.l.b16 %v921
          %v938 = vunpack.c.l.b16 %v922
          %v939 = vunpack.c.l.b16 %v923
          %v940 = vunpack.c.l.b16 %v924
          %v941 = vunpack.c.l.b16 %v925
          %v942 = vunpack.c.l.b16 %v926
          %v943 = vpack.c.b16 %v936, %v935
          %v944 = vpack.c.b16 %v938, %v937
          %v945 = vpack.c.b16 %v940, %v939
          %v946 = vpack.c.b16 %v942, %v941
          %v951 = vld [vmem:[%s3] sm:$0xf]
          %v952 = vld [vmem:[%s3 + $0x4] sm:$0xf]
          %v953 = vld [vmem:[%s3 + $0x8] sm:$0xf]
          %v954 = vld [vmem:[%s3 + $0xc] sm:$0xf]
          %v955 = vld [vmem:[%s3 + $0x10] sm:$0xf]
          %v956 = vld [vmem:[%s3 + $0x14] sm:$0xf]
          %v957 = vld [vmem:[%s3 + $0x18] sm:$0xf]
          %v958 = vld [vmem:[%s3 + $0x1c] sm:$0xf]
          %v959 = vld [vmem:[%s3 + $0x20] sm:$0xf]
          %v960 = vld [vmem:[%s3 + $0x24] sm:$0xf]
          %v961 = vld [vmem:[%s3 + $0x28] sm:$0xf]
          %v962 = vld [vmem:[%s3 + $0x2c] sm:$0xf]
          %v963 = vld [vmem:[%s3 + $0x30] sm:$0xf]
          %v964 = vld [vmem:[%s3 + $0x34] sm:$0xf]
          %v965 = vld [vmem:[%s3 + $0x38] sm:$0xf]
          %v966 = vld [vmem:[%s3 + $0x3c] sm:$0xf]
          %v967 = vld [vmem:[%s3 + $0x40] sm:$0xf]
          %v968 = vld [vmem:[%s3 + $0x44] sm:$0xf]
          %v969 = vld [vmem:[%s3 + $0x48] sm:$0xf]
          %v970 = vld [vmem:[%s3 + $0x4c] sm:$0xf]
          %v971 = vld [vmem:[%s3 + $0x50] sm:$0xf]
          %v972 = vld [vmem:[%s3 + $0x54] sm:$0xf]
          %v973 = vld [vmem:[%s3 + $0x58] sm:$0xf]
          %v974 = vld [vmem:[%s3 + $0x5c] sm:$0xf]
          %v975 = vld [vmem:[%s3 + $0x60] sm:$0xf]
          %v976 = vld [vmem:[%s3 + $0x64] sm:$0xf]
          %v977 = vld [vmem:[%s3 + $0x68] sm:$0xf]
          %v978 = vld [vmem:[%s3 + $0x6c] sm:$0xf]
          %v979 = vld [vmem:[%s3 + $0x70] sm:$0xf]
          %v980 = vld [vmem:[%s3 + $0x74] sm:$0xf]
          %v981 = vld [vmem:[%s3 + $0x78] sm:$0xf]
          %v982 = vld [vmem:[%s3 + $0x7c] sm:$0xf]
          %v983 = vld [vmem:[%s3 + $0x80] sm:$0xf]
          %v984 = vld [vmem:[%s3 + $0x84] sm:$0xf]
          %v985 = vld [vmem:[%s3 + $0x88] sm:$0xf]
          %v986 = vld [vmem:[%s3 + $0x8c] sm:$0xf]
          %v987 = vld [vmem:[%s3 + $0x90] sm:$0xf]
          %v988 = vld [vmem:[%s3 + $0x94] sm:$0xf]
          %v989 = vld [vmem:[%s3 + $0x98] sm:$0xf]
          %v990 = vld [vmem:[%s3 + $0x9c] sm:$0xf]
          %v991 = vld [vmem:[%s3 + $0xa0] sm:$0xf]
          %v992 = vld [vmem:[%s3 + $0xa4] sm:$0xf]
          %v993 = vld [vmem:[%s3 + $0xa8] sm:$0xf]
          %v994 = vld [vmem:[%s3 + $0xac] sm:$0xf]
          %v995 = vld [vmem:[%s3 + $0xb0] sm:$0xf]
          %v996 = vld [vmem:[%s3 + $0xb4] sm:$0xf]
          %v997 = vld [vmem:[%s3 + $0xb8] sm:$0xf]
          %v998 = vld [vmem:[%s3 + $0xbc] sm:$0xf]
          %v999 = vld [vmem:[%s3 + $0xc0] sm:$0xf]
          %v1000 = vld [vmem:[%s3 + $0xc4] sm:$0xf]
          %v1001 = vld [vmem:[%s3 + $0xc8] sm:$0xf]
          %v1002 = vld [vmem:[%s3 + $0xcc] sm:$0xf]
          %v1003 = vld [vmem:[%s3 + $0xd0] sm:$0xf]
          %v1004 = vld [vmem:[%s3 + $0xd4] sm:$0xf]
          %v1005 = vld [vmem:[%s3 + $0xd8] sm:$0xf]
          %v1006 = vld [vmem:[%s3 + $0xdc] sm:$0xf]
          %v1007 = vld [vmem:[%s3 + $0xe0] sm:$0xf]
          %v1008 = vld [vmem:[%s3 + $0xe4] sm:$0xf]
          %v1009 = vld [vmem:[%s3 + $0xe8] sm:$0xf]
          %v1010 = vld [vmem:[%s3 + $0xec] sm:$0xf]
          %v1011 = vld [vmem:[%s3 + $0xf0] sm:$0xf]
          %v1012 = vld [vmem:[%s3 + $0xf4] sm:$0xf]
          %v1013 = vld [vmem:[%s3 + $0xf8] sm:$0xf]
          %v1014 = vld [vmem:[%s3 + $0xfc] sm:$0xf]
          %v1015 = vld [vmem:[%s4] sm:$0x1]
          %v1017 = vlaneseq
          %v1018 = vshrl.u32 %v1017, 7
          %v1019 = vsub.s32 0, %v1018
          %v1020 = vrot.slane %v1015, %v1019
          %v1086 = vunpack.c.l.b16 %v951
          %v1087 = vunpack.c.l.b16 %v952
          %v1088 = vunpack.c.l.b16 %v953
          %v1089 = vunpack.c.l.b16 %v954
          %v1090 = vunpack.c.l.b16 %v955
          %v1091 = vunpack.c.l.b16 %v956
          %v1092 = vunpack.c.l.b16 %v957
          %v1093 = vunpack.c.l.b16 %v958
          %v1094 = vunpack.c.l.b16 %v959
          %v1095 = vunpack.c.l.b16 %v960
          %v1096 = vunpack.c.l.b16 %v961
          %v1097 = vunpack.c.l.b16 %v962
          %v1098 = vunpack.c.l.b16 %v963
          %v1099 = vunpack.c.l.b16 %v964
          %v1100 = vunpack.c.l.b16 %v965
          %v1101 = vunpack.c.l.b16 %v966
          %v1102 = vunpack.c.l.b16 %v967
          %v1103 = vunpack.c.l.b16 %v968
          %v1104 = vunpack.c.l.b16 %v969
          %v1105 = vunpack.c.l.b16 %v970
          %v1106 = vunpack.c.l.b16 %v971
          %v1107 = vunpack.c.l.b16 %v972
          %v1108 = vunpack.c.l.b16 %v973
          %v1109 = vunpack.c.l.b16 %v974
          %v1110 = vunpack.c.l.b16 %v975
          %v1111 = vunpack.c.l.b16 %v976
          %v1112 = vunpack.c.l.b16 %v977
          %v1113 = vunpack.c.l.b16 %v978
          %v1114 = vunpack.c.l.b16 %v979
          %v1115 = vunpack.c.l.b16 %v980
          %v1116 = vunpack.c.l.b16 %v981
          %v1117 = vunpack.c.l.b16 %v982
          %v1118 = vunpack.c.l.b16 %v983
          %v1119 = vunpack.c.l.b16 %v984
          %v1120 = vunpack.c.l.b16 %v985
          %v1121 = vunpack.c.l.b16 %v986
          %v1122 = vunpack.c.l.b16 %v987
          %v1123 = vunpack.c.l.b16 %v988
          %v1124 = vunpack.c.l.b16 %v989
          %v1125 = vunpack.c.l.b16 %v990
          %v1126 = vunpack.c.l.b16 %v991
          %v1127 = vunpack.c.l.b16 %v992
          %v1128 = vunpack.c.l.b16 %v993
          %v1129 = vunpack.c.l.b16 %v994
          %v1130 = vunpack.c.l.b16 %v995
          %v1131 = vunpack.c.l.b16 %v996
          %v1132 = vunpack.c.l.b16 %v997
          %v1133 = vunpack.c.l.b16 %v998
          %v1134 = vunpack.c.l.b16 %v999
          %v1135 = vunpack.c.l.b16 %v1000
          %v1136 = vunpack.c.l.b16 %v1001
          %v1137 = vunpack.c.l.b16 %v1002
          %v1138 = vunpack.c.l.b16 %v1003
          %v1139 = vunpack.c.l.b16 %v1004
          %v1140 = vunpack.c.l.b16 %v1005
          %v1141 = vunpack.c.l.b16 %v1006
          %v1142 = vunpack.c.l.b16 %v1007
          %v1143 = vunpack.c.l.b16 %v1008
          %v1144 = vunpack.c.l.b16 %v1009
          %v1145 = vunpack.c.l.b16 %v1010
          %v1146 = vunpack.c.l.b16 %v1011
          %v1147 = vunpack.c.l.b16 %v1012
          %v1148 = vunpack.c.l.b16 %v1013
          %v1149 = vunpack.c.l.b16 %v1014
          %v1150 = vpack.c.b16 %v1087, %v1086
          %v1151 = vpack.c.b16 %v1089, %v1088
          %v1152 = vpack.c.b16 %v1091, %v1090
          %v1153 = vpack.c.b16 %v1093, %v1092
          %v1154 = vpack.c.b16 %v1095, %v1094
          %v1155 = vpack.c.b16 %v1097, %v1096
          %v1156 = vpack.c.b16 %v1099, %v1098
          %v1157 = vpack.c.b16 %v1101, %v1100
          %v1158 = vpack.c.b16 %v1103, %v1102
          %v1159 = vpack.c.b16 %v1105, %v1104
          %v1160 = vpack.c.b16 %v1107, %v1106
          %v1161 = vpack.c.b16 %v1109, %v1108
          %v1162 = vpack.c.b16 %v1111, %v1110
          %v1163 = vpack.c.b16 %v1113, %v1112
          %v1164 = vpack.c.b16 %v1115, %v1114
          %v1165 = vpack.c.b16 %v1117, %v1116
          %v1166 = vpack.c.b16 %v1119, %v1118
          %v1167 = vpack.c.b16 %v1121, %v1120
          %v1168 = vpack.c.b16 %v1123, %v1122
          %v1169 = vpack.c.b16 %v1125, %v1124
          %v1170 = vpack.c.b16 %v1127, %v1126
          %v1171 = vpack.c.b16 %v1129, %v1128
          %v1172 = vpack.c.b16 %v1131, %v1130
          %v1173 = vpack.c.b16 %v1133, %v1132
          %v1174 = vpack.c.b16 %v1135, %v1134
          %v1175 = vpack.c.b16 %v1137, %v1136
          %v1176 = vpack.c.b16 %v1139, %v1138
          %v1177 = vpack.c.b16 %v1141, %v1140
          %v1178 = vpack.c.b16 %v1143, %v1142
          %v1179 = vpack.c.b16 %v1145, %v1144
          %v1180 = vpack.c.b16 %v1147, %v1146
          %v1181 = vpack.c.b16 %v1149, %v1148
          %1214 = vmatprep.subr.bf16.mxu0 0
          %1215 = vmatpush1.bf16.msra.mxu0 %v1150
          %1216 = vmatprep.subr.bf16.mxu0 0
          %1217 = vmatpush1.bf16.msra.mxu0 %v1151
          %1218 = vmatprep.subr.bf16.mxu0 0
          %1219 = vmatpush1.bf16.msra.mxu0 %v1152
          %1220 = vmatprep.subr.bf16.mxu0 0
          %1221 = vmatpush1.bf16.msra.mxu0 %v1153
          %1222 = vmatprep.subr.bf16.mxu0 0
          %1223 = vmatpush1.bf16.msra.mxu0 %v1154
          %1224 = vmatprep.subr.bf16.mxu0 0
          %1225 = vmatpush1.bf16.msra.mxu0 %v1155
          %1226 = vmatprep.subr.bf16.mxu0 0
          %1227 = vmatpush1.bf16.msra.mxu0 %v1156
          %1228 = vmatprep.subr.bf16.mxu0 0
          %1229 = vmatpush1.bf16.msra.mxu0 %v1157
          %1230 = vmatprep.subr.bf16.mxu0 0
          %1231 = vmatpush1.bf16.msra.mxu0 %v1158
          %1232 = vmatprep.subr.bf16.mxu0 0
          %1233 = vmatpush1.bf16.msra.mxu0 %v1159
          %1234 = vmatprep.subr.bf16.mxu0 0
          %1235 = vmatpush1.bf16.msra.mxu0 %v1160
          %1236 = vmatprep.subr.bf16.mxu0 0
          %1237 = vmatpush1.bf16.msra.mxu0 %v1161
          %1238 = vmatprep.subr.bf16.mxu0 0
          %1239 = vmatpush1.bf16.msra.mxu0 %v1162
          %1240 = vmatprep.subr.bf16.mxu0 0
          %1241 = vmatpush1.bf16.msra.mxu0 %v1163
          %1242 = vmatprep.subr.bf16.mxu0 0
          %1243 = vmatpush1.bf16.msra.mxu0 %v1164
          %1244 = vmatprep.subr.bf16.mxu0 0
          %1245 = vmatpush1.bf16.msra.mxu0 %v1165
          %1246 = vmatprep.mubr.bf16.mxu0 %v903
          %1247 = vmatmul.mubr.bf16.gmra.mrb[0].mxu0 %v891
          %v1248 = vpop.f32.mrb[0].mxu0
          %v1249 = vadd.f32 %v1020, %v1248
          %v1250 = vpop.f32.mrb[0].mxu0
          %v1251 = vpop.f32.mrb[0].mxu0
          %v1252 = vadd.f32 %v1020, %v1251
          %v1253 = vpop.f32.mrb[0].mxu0
          %1254 = vmatprep.mubr.bf16.mxu0 %v904
          %1255 = vmatmul.mubr.bf16.gmra.mrb[0].mxu0 %v892
          %v1256 = vpop.f32.mrb[0].mxu0
          %v1257 = vadd.f32 %v1020, %v1256
          %v1258 = vpop.f32.mrb[0].mxu0
          %v1259 = vpop.f32.mrb[0].mxu0
          %v1260 = vadd.f32 %v1020, %v1259
          %v1261 = vpop.f32.mrb[0].mxu0
          %1262 = vmatprep.mubr.bf16.mxu0 %v905
          %1263 = vmatmul.mubr.bf16.gmra.mrb[0].mxu0 %v893
          %v1264 = vpop.f32.mrb[0].mxu0
          %v1265 = vadd.f32 %v1020, %v1264
          %v1266 = vpop.f32.mrb[0].mxu0
          %v1267 = vpop.f32.mrb[0].mxu0
          %v1268 = vadd.f32 %v1020, %v1267
          %v1269 = vpop.f32.mrb[0].mxu0
          %1270 = vmatprep.mubr.bf16.mxu0 %v906
          %1271 = vmatmul.mubr.bf16.gmra.mrb[0].mxu0 %v894
          %v1272 = vpop.f32.mrb[0].mxu0
          %v1273 = vadd.f32 %v1020, %v1272
          %v1274 = vpop.f32.mrb[0].mxu0
          %v1275 = vpop.f32.mrb[0].mxu0
          %v1276 = vadd.f32 %v1020, %v1275
          %v1277 = vpop.f32.mrb[0].mxu0
          %1278 = vdwg.mxu0
          %1279 = vmatprep.subr.bf16.mxu0 0
          %1280 = vmatpush1.bf16.msra.mxu0 %v1166
          %1281 = vmatprep.subr.bf16.mxu0 0
          %1282 = vmatpush1.bf16.msra.mxu0 %v1167
          %1283 = vmatprep.subr.bf16.mxu0 0
          %1284 = vmatpush1.bf16.msra.mxu0 %v1168
          %1285 = vmatprep.subr.bf16.mxu0 0
          %1286 = vmatpush1.bf16.msra.mxu0 %v1169
          %1287 = vmatprep.subr.bf16.mxu0 0
          %1288 = vmatpush1.bf16.msra.mxu0 %v1170
          %1289 = vmatprep.subr.bf16.mxu0 0
          %1290 = vmatpush1.bf16.msra.mxu0 %v1171
          %1291 = vmatprep.subr.bf16.mxu0 0
          %1292 = vmatpush1.bf16.msra.mxu0 %v1172
          %1293 = vmatprep.subr.bf16.mxu0 0
          %1294 = vmatpush1.bf16.msra.mxu0 %v1173
          %1295 = vmatprep.subr.bf16.mxu0 0
          %1296 = vmatpush1.bf16.msra.mxu0 %v1174
          %1297 = vmatprep.subr.bf16.mxu0 0
          %1298 = vmatpush1.bf16.msra.mxu0 %v1175
          %1299 = vmatprep.subr.bf16.mxu0 0
          %1300 = vmatpush1.bf16.msra.mxu0 %v1176
          %1301 = vmatprep.subr.bf16.mxu0 0
          %1302 = vmatpush1.bf16.msra.mxu0 %v1177
          %1303 = vmatprep.subr.bf16.mxu0 0
          %1304 = vmatpush1.bf16.msra.mxu0 %v1178
          %1305 = vmatprep.subr.bf16.mxu0 0
          %1306 = vmatpush1.bf16.msra.mxu0 %v1179
          %1307 = vmatprep.subr.bf16.mxu0 0
          %1308 = vmatpush1.bf16.msra.mxu0 %v1180
          %1309 = vmatprep.subr.bf16.mxu0 0
          %1310 = vmatpush1.bf16.msra.mxu0 %v1181
          %1311 = vmatprep.mubr.bf16.mxu0 %v943
          %1312 = vmatmul.mubr.bf16.gmra.mrb[0].mxu0 %v915
          %v1313 = vpop.f32.mrb[0].mxu0
          %v1314 = vadd.f32 %v1249, %v1313
          %v1315 = vpop.f32.mrb[0].mxu0
          %v1316 = vpop.f32.mrb[0].mxu0
          %v1317 = vadd.f32 %v1252, %v1316
          %v1318 = vpop.f32.mrb[0].mxu0
          %1319 = vmatprep.mubr.bf16.mxu0 %v944
          %1320 = vmatmul.mubr.bf16.gmra.mrb[0].mxu0 %v916
          %v1321 = vpop.f32.mrb[0].mxu0
          %v1322 = vadd.f32 %v1257, %v1321
          %v1323 = vpop.f32.mrb[0].mxu0
          %v1324 = vpop.f32.mrb[0].mxu0
          %v1325 = vadd.f32 %v1260, %v1324
          %v1326 = vpop.f32.mrb[0].mxu0
          %1327 = vmatprep.mubr.bf16.mxu0 %v945
          %1328 = vmatmul.mubr.bf16.gmra.mrb[0].mxu0 %v917
          %v1329 = vpop.f32.mrb[0].mxu0
          %v1330 = vadd.f32 %v1265, %v1329
          %v1331 = vpop.f32.mrb[0].mxu0
          %v1332 = vpop.f32.mrb[0].mxu0
          %v1333 = vadd.f32 %v1268, %v1332
          %v1334 = vpop.f32.mrb[0].mxu0
          %1335 = vmatprep.mubr.bf16.mxu0 %v946
          %1336 = vmatmul.mubr.bf16.gmra.mrb[0].mxu0 %v918
          %v1337 = vpop.f32.mrb[0].mxu0
          %v1338 = vadd.f32 %v1273, %v1337
          %v1339 = vpop.f32.mrb[0].mxu0
          %v1340 = vpop.f32.mrb[0].mxu0
          %v1341 = vadd.f32 %v1276, %v1340
          %v1342 = vpop.f32.mrb[0].mxu0
          %1343 = vdwg.mxu0
          %v1344 = vlaneseq
          %v1345 = vand.u32 %v1344, 127
          %vm1346 = vcmp.lt.s32.totalorder %v1345, 8
          %v1347 = vsel %vm1346, %v1314, -1e+30
          %v1348 = vsel %vm1346, %v1317, -1e+30
          %v1349 = vsel %vm1346, %v1322, -1e+30
          %v1350 = vsel %vm1346, %v1325, -1e+30
          %v1351 = vsel %vm1346, %v1330, -1e+30
          %v1352 = vsel %vm1346, %v1333, -1e+30
          %v1353 = vsel %vm1346, %v1338, -1e+30
          %v1354 = vsel %vm1346, %v1341, -1e+30
          %1355 = vmax.xlane.f32.xlu0 %v1347
          %v1356 = vpop.xlane.xlu0 %1355
          %1357 = vmax.xlane.f32.xlu0 %v1348
          %v1358 = vpop.xlane.xlu0 %1357
          %1359 = vmax.xlane.f32.xlu0 %v1349
          %v1360 = vpop.xlane.xlu0 %1359
          %1361 = vmax.xlane.f32.xlu0 %v1350
          %v1362 = vpop.xlane.xlu0 %1361
          %1363 = vmax.xlane.f32.xlu0 %v1351
          %v1364 = vpop.xlane.xlu0 %1363
          %1365 = vmax.xlane.f32.xlu0 %v1352
          %v1366 = vpop.xlane.xlu0 %1365
          %1367 = vmax.xlane.f32.xlu0 %v1353
          %v1368 = vpop.xlane.xlu0 %1367
          %1369 = vmax.xlane.f32.xlu0 %v1354
          %v1370 = vpop.xlane.xlu0 %1369
          %v1371 = vsub.f32 %v1347, %v1356
          %v1372 = vsub.f32 %v1348, %v1358
          %v1373 = vsub.f32 %v1349, %v1360
          %v1374 = vsub.f32 %v1350, %v1362
          %v1375 = vsub.f32 %v1351, %v1364
          %v1376 = vsub.f32 %v1352, %v1366
          %v1377 = vsub.f32 %v1353, %v1368
          %v1378 = vsub.f32 %v1354, %v1370
          %v1379 = vmul.f32 %v1371, 1.442695
          %v1380 = vpow.pop %v1379
          %v1381 = vmul.f32 %v1372, 1.442695
          %v1382 = vpow.pop %v1381
          %v1383 = vmul.f32 %v1373, 1.442695
          %v1384 = vpow.pop %v1383
          %v1385 = vmul.f32 %v1374, 1.442695
          %v1386 = vpow.pop %v1385
          %v1387 = vmul.f32 %v1375, 1.442695
          %v1388 = vpow.pop %v1387
          %v1389 = vmul.f32 %v1376, 1.442695
          %v1390 = vpow.pop %v1389
          %v1391 = vmul.f32 %v1377, 1.442695
          %v1392 = vpow.pop %v1391
          %v1393 = vmul.f32 %v1378, 1.442695
          %v1394 = vpow.pop %v1393
          %v1395 = vsel %vm1346, %v1380, 0.0
          %v1396 = vsel %vm1346, %v1382, 0.0
          %v1397 = vsel %vm1346, %v1384, 0.0
          %v1398 = vsel %vm1346, %v1386, 0.0
          %v1399 = vsel %vm1346, %v1388, 0.0
          %v1400 = vsel %vm1346, %v1390, 0.0
          %v1401 = vsel %vm1346, %v1392, 0.0
          %v1402 = vsel %vm1346, %v1394, 0.0
          %1403 = vadd.xlane.f32.xlu0 %v1395
          %v1404 = vpop.xlane.xlu0 %1403
          %1405 = vadd.xlane.f32.xlu0 %v1396
          %v1406 = vpop.xlane.xlu0 %1405
          %1407 = vadd.xlane.f32.xlu0 %v1397
          %v1408 = vpop.xlane.xlu0 %1407
          %1409 = vadd.xlane.f32.xlu0 %v1398
          %v1410 = vpop.xlane.xlu0 %1409
          %1411 = vadd.xlane.f32.xlu0 %v1399
          %v1412 = vpop.xlane.xlu0 %1411
          %1413 = vadd.xlane.f32.xlu0 %v1400
          %v1414 = vpop.xlane.xlu0 %1413
          %1415 = vadd.xlane.f32.xlu0 %v1401
          %v1416 = vpop.xlane.xlu0 %1415
          %1417 = vadd.xlane.f32.xlu0 %v1402
          %v1418 = vpop.xlane.xlu0 %1417
          %v1419 = vlog2.pop %v1404
          %v1420 = vmul.f32 %v1419, 0.6931472
          %v1421 = vlog2.pop %v1406
          %v1422 = vmul.f32 %v1421, 0.6931472
          %v1423 = vlog2.pop %v1408
          %v1424 = vmul.f32 %v1423, 0.6931472
          %v1425 = vlog2.pop %v1410
          %v1426 = vmul.f32 %v1425, 0.6931472
          %v1427 = vlog2.pop %v1412
          %v1428 = vmul.f32 %v1427, 0.6931472
          %v1429 = vlog2.pop %v1414
          %v1430 = vmul.f32 %v1429, 0.6931472
          %v1431 = vlog2.pop %v1416
          %v1432 = vmul.f32 %v1431, 0.6931472
          %v1433 = vlog2.pop %v1418
          %v1434 = vmul.f32 %v1433, 0.6931472
          %v1435 = vsub.f32 %v1371, %v1420
          %v1436 = vsub.f32 %v1372, %v1422
          %v1437 = vsub.f32 %v1373, %v1424
          %v1438 = vsub.f32 %v1374, %v1426
          %v1439 = vsub.f32 %v1375, %v1428
          %v1440 = vsub.f32 %v1376, %v1430
          %v1441 = vsub.f32 %v1377, %v1432
          %v1442 = vsub.f32 %v1378, %v1434
          %1443 = vst [vmem:[%s418] sm:$0xff] %v1435
          %1444 = vst [vmem:[%s418 + $0x8] sm:$0xff] %v1436
          %1445 = vst [vmem:[%s418 + $0x10] sm:$0xff] %v1437
          %1446 = vst [vmem:[%s418 + $0x18] sm:$0xff] %v1438
          %1447 = vst [vmem:[%s418 + $0x20] sm:$0xff] %v1439
          %1448 = vst [vmem:[%s418 + $0x28] sm:$0xff] %v1440
          %1449 = vst [vmem:[%s418 + $0x30] sm:$0xff] %v1441
          %1450 = vst [vmem:[%s418 + $0x38] sm:$0xff] %v1442
        $region89: #{rgcn_forward.3} parent=76 // pred_fallthru
          _
        %s1451 = smul.u32 8, %s20
        %p1452 = scmp.lt.s32.totalorder %s1451, 15
        %s1453 = scalar_select %p1452, %s1451, 15
        %s1454 = smul.addr %s1453, 8
        %s1455 = scalar_lea.vmem %s5, %s1454
        // Predicated region
        $region90: #{rgcn_forward.3} parent=76 // pred_check
          %p1456 = pneg %p168
        $region91: #{rgcn_forward.3} parent=76 // pred_check_branch
          %1458 = sbr.rel (%p1456) target = $region93
        $region92: #{rgcn_forward.3} parent=76 // pred_region
          %s1459 = smul.u32 8, %s20
        $region93: #{rgcn_forward.3} parent=76 // pred_fallthru
          _
      $region77: #{rgcn_forward.3} parent=5 // pred_fallthru
        _
      %p1460 = scmp.le.s32.totalorder 2, %s11
      // Predicated region
      $region94: #{rgcn_forward.3} parent=5 // pred_check
        %p1461 = pneg %p1460
      $region95: #{rgcn_forward.3} parent=5 // pred_check_branch
        %1463 = sbr.rel (%p1461) target = $region97
      $region96: #{rgcn_forward.3} parent=5 // pred_region
        %s1464 = ssub.s32 %s11, 2
        // Predicated region
        $region98: #{rgcn_forward.3} parent=96 // pred_check
          %p1465 = pneg %p174
        $region99: #{rgcn_forward.3} parent=96 // pred_check_branch
          %1467 = sbr.rel (%p1465) target = $region101
        $region100: #{rgcn_forward.3} parent=96 // pred_region
          %s1468 = smul.u32 8, %s22
          %p1469 = scmp.lt.s32.totalorder %s1468, 15
          %s1470 = scalar_select %p1469, %s1468, 15
          %s1471 = smul.addr %s1470, 8
          %s1472 = scalar_lea.vmem %s5, %s1471
        $region101: #{rgcn_forward.3} parent=96 // pred_fallthru
          _
      $region97: #{rgcn_forward.3} parent=5 // pred_fallthru
        _
    $region6: #{rgcn_forward.3} parent=1 // loop_footer
      %s15 = sadd.s32 1, %s11
    $region7: #{rgcn_forward.3} parent=1 // loop_footer_branch
      %10 = sbr.rel target = $region3
    $region8: #{rgcn_forward.3} parent=1 // loop_exit
      _

</llo_original>
